<compile_context>
chip_gen: v7x
topology: tpu7x:2x2x1
jax: 0.10.0
libtpu: 0.0.40
codegen_flags: <defaults>
</compile_context>

<pallas_src>
import functools

import jax
import jax.numpy as jnp
from jax.experimental import pallas as pl
from jax.experimental.pallas import tpu as pltpu

EPS = 1e-5


# ------------------------------ fused kernel ------------------------------
def _ms_tcn_fused_kernel(x_ref, w1_ref, b1_ref, w2_ref, b2_ref, ps_ref, pt_ref,
                         o_ref, *, bc, dilations, mm_dtype):
    """One N*V tile of the whole MultiScale_TemporalConv forward pass.

    x_ref : (T, tNV, Cin)      input activations (also the identity residual)
    w1_ref: (Cin, (nd+2)*bc)   fused 1x1-conv weights, BN scale folded in
    b1_ref: (1, (nd+2)*bc)     fused 1x1-conv bias + BN shift
    w2_ref: (3*nd*bc, nd*bc)   block-diagonal stacked temporal-conv weights (BN folded)
    b2_ref: (1, nd*bc)         temporal-conv bias + BN shift
    ps_ref/pt_ref: (1, bc)     maxpool-branch BN scale / shift
    o_ref : (T, tNV, Cout)
    """
    T, tNV, Cin = x_ref.shape
    nd = len(dilations)
    M = T * tNV

    x = x_ref[...]                                   # f32; kept as the residual
    x2d = x.reshape(M, Cin)                          # tNV is a multiple of 8 -> free collapse

    # ---- stage 1: all (nd+2) 1x1 convs + folded BN as ONE MXU matmul ----
    u = jnp.dot(x2d.astype(mm_dtype), w1_ref[...],
                preferred_element_type=jnp.float32) + b1_ref[...]
    act_cols = (nd + 1) * bc
    u_act = jnp.maximum(u[:, :act_cols], 0.0)        # branches 0..nd have a ReLU
    u_pass = u[:, act_cols:]                         # last branch: 1x1 + BN only

    # ---- stage 2: the nd dilated temporal convs as ONE stacked matmul ----
    # Channel order of `stack`: [tap(-d) b0..b3 | tap(0) b0..b3 | tap(+d) b0..b3].
    # A temporal shift of d is a row shift of d*tNV in the flattened (T*tNV, C)
    # layout; boundaries are zero-filled (== the conv's zero padding of u).
    parts = []
    for i, d in enumerate(dilations):                # tap kk=0 -> u[t - d]
        ub = u_act[:, i * bc:(i + 1) * bc]
        z = jnp.zeros((d * tNV, bc), u_act.dtype)
        parts.append(jnp.concatenate([z, ub[:M - d * tNV]], axis=0))
    parts.append(u_act[:, :nd * bc])                 # tap kk=1 -> u[t] (all branches)
    for i, d in enumerate(dilations):                # tap kk=2 -> u[t + d]
        ub = u_act[:, i * bc:(i + 1) * bc]
        z = jnp.zeros((d * tNV, bc), u_act.dtype)
        parts.append(jnp.concatenate([ub[d * tNV:], z], axis=0))
    stack = jnp.concatenate(parts, axis=-1)          # (M, 3*nd*bc)

    y_dil = jnp.dot(stack.astype(mm_dtype), w2_ref[...],
                    preferred_element_type=jnp.float32) + b2_ref[...]

    # ---- maxpool (3,1) branch + folded BN ----
    # u_act >= 0 (post-ReLU), so zero boundary fill is equivalent to -inf pooling pad.
    u_p = u_act[:, nd * bc:(nd + 1) * bc]
    zrow = jnp.zeros((tNV, bc), u_act.dtype)
    prev = jnp.concatenate([zrow, u_p[:M - tNV]], axis=0)
    nxt = jnp.concatenate([u_p[tNV:], zrow], axis=0)
    y_pool = jnp.maximum(jnp.maximum(prev, u_p), nxt) * ps_ref[...] + pt_ref[...]

    # ---- concat branches, identity residual, final ReLU, lane-dense store ----
    out = jnp.concatenate([y_dil, y_pool, u_pass], axis=-1)   # (M, Cout)
    out = jnp.maximum(out + x2d, 0.0)
    o_ref[...] = out.reshape(T, tNV, -1).astype(o_ref.dtype)


# ------------------------------- parameters -------------------------------
def init_params(key, c_in, c_out, dilations, ksize=3):
    nb = len(dilations) + 2
    assert c_out % nb == 0
    bc = c_out // nb
    ks = iter(jax.random.split(key, 64))

    def nrm(k, shape, s=0.1):
        return s * jax.random.normal(k, shape, jnp.float32)

    def bn(k):
        k1, k2, k3, k4 = jax.random.split(k, 4)
        gamma = jax.random.uniform(k1, (bc,), jnp.float32, 0.5, 1.5)
        beta = nrm(k2, (bc,))
        mean = nrm(k3, (bc,))
        var = jax.random.uniform(k4, (bc,), jnp.float32, 0.5, 1.5)
        return gamma, beta, mean, var

    p = {'w1': [], 'b1': [], 'bn1': [], 'w2': [], 'b2': [], 'bn2': []}
    for _ in range(nb):                       # 1x1 conv of each branch (torch layout (out,in))
        p['w1'].append(nrm(next(ks), (bc, c_in)))
        p['b1'].append(nrm(next(ks), (bc,)))
        p['bn1'].append(bn(next(ks)))
    for _ in dilations:                       # temporal conv of dilation branches (out,in,k)
        p['w2'].append(nrm(next(ks), (bc, bc, ksize)))
        p['b2'].append(nrm(next(ks), (bc,)))
        p['bn2'].append(bn(next(ks)))
    p['bn_pool'] = bn(next(ks))               # BN after the maxpool branch
    return p


def _fold_bn(gamma, beta, mean, var):
    inv = gamma / jnp.sqrt(var + EPS)
    return inv, beta - mean * inv


def _fold_params(p, dilations, matmul_dtype):
    """Fold conv bias + inference BatchNorm into weights / per-channel shifts."""
    nd = len(dilations)
    nb = nd + 2
    bc = p['w1'][0].shape[0]

    # stage 1:  BN(x @ W1.T + b1) == x @ w1f + b1f
    w_cols, b_cols = [], []
    for i in range(nb):
        s, t = _fold_bn(*p['bn1'][i])
        w_cols.append(p['w1'][i].T * s[None, :])                 # (Cin, bc)
        b_cols.append(p['b1'][i] * s + t)
    w1f = jnp.concatenate(w_cols, axis=1).astype(matmul_dtype)   # (Cin, nb*bc)
    b1f = jnp.concatenate(b_cols)[None, :].astype(jnp.float32)

    # stage 2: block-diagonal stacked temporal-conv weight (taps x branches on K)
    w2f = jnp.zeros((3 * nd * bc, nd * bc), jnp.float32)
    b2_cols = []
    for i in range(nd):
        s, t = _fold_bn(*p['bn2'][i])
        for kk in range(3):
            blk = p['w2'][i][:, :, kk].T * s[None, :]            # (bc_in, bc_out)
            r0 = (kk * nd + i) * bc
            w2f = w2f.at[r0:r0 + bc, i * bc:(i + 1) * bc].set(blk)
        b2_cols.append(p['b2'][i] * s + t)
    w2f = w2f.astype(matmul_dtype)
    b2f = jnp.concatenate(b2_cols)[None, :].astype(jnp.float32)

    ps, pt = _fold_bn(*p['bn_pool'])
    return w1f, b1f, w2f, b2f, ps[None, :], pt[None, :]


def _choose_nv_tile(NV, T, Cin, Cout, bc, nd, budget_bytes=6 * 1024 * 1024):
    """Largest multiple-of-8 divisor of N*V whose per-step VMEM stays in budget
    (sized conservatively so double-buffered blocks fit v7x's 64 MiB VMEM)."""
    if NV % 8 != 0:
        return NV                                   # small / odd shapes: one full block
    # rough f32 bytes per N*V row live in one grid step (x, out, u, stack, y_dil)
    per_row = 4 * T * (2 * Cin + 2 * Cout + (nd + 2) * bc + 4 * nd * bc)
    tile = 8
    for t in range(8, NV + 1, 8):
        if NV % t == 0 and t * per_row <= budget_bytes:
            tile = t
    return tile


# --------------------------- Pallas forward pass ---------------------------
def ms_tcn_forward(x_nchw, p, dilations, ksize=3, nv_tile=None,
                   matmul_dtype=jnp.float32):
    assert ksize == 3, "kernel specialized for the module default kernel_size=3"
    N, Cin, T, V = x_nchw.shape
    nd = len(dilations)
    nb = nd + 2
    bc = p['w1'][0].shape[0]
    Cout = nb * bc
    assert Cin == Cout, "identity residual path requires in_channels == out_channels"
    assert max(dilations) < T, "dilation must be smaller than the temporal extent"
    NV = N * V

    # time-major, channel-last activation layout
    x_tl = jnp.transpose(x_nchw, (2, 0, 3, 1)).reshape(T, NV, Cin).astype(jnp.float32)

    w1f, b1f, w2f, b2f, ps, pt = _fold_params(p, dilations, matmul_dtype)

    if nv_tile is None:
        nv_tile = _choose_nv_tile(NV, T, Cin, Cout, bc, nd)
    assert NV % nv_tile == 0
    grid = (NV // nv_tile,)

    def _const(arr):            # small parameter array: whole-array block, resident
        return pl.BlockSpec(arr.shape, lambda j: (0,) * arr.ndim)

    out_tl = pl.pallas_call(
        functools.partial(_ms_tcn_fused_kernel, bc=bc,
                          dilations=tuple(dilations), mm_dtype=matmul_dtype),
        out_shape=jax.ShapeDtypeStruct((T, NV, Cout), jnp.float32),
        grid=grid,
        in_specs=[
            pl.BlockSpec((T, nv_tile, Cin), lambda j: (0, j, 0)),
            _const(w1f), _const(b1f), _const(w2f), _const(b2f),
            _const(ps), _const(pt),
        ],
        out_specs=pl.BlockSpec((T, nv_tile, Cout), lambda j: (0, j, 0)),
        compiler_params=pltpu.CompilerParams(
            dimension_semantics=("parallel",),
            vmem_limit_bytes=48 * 1024 * 1024),
    )(x_tl, w1f, b1f, w2f, b2f, ps, pt)

    return jnp.transpose(out_tl.reshape(T, N, V, Cout), (1, 3, 0, 2))   # back to NCHW


# ------------------------------ JAX reference ------------------------------
def _bn_ref(x, gamma, beta, mean, var):
    inv = gamma / jnp.sqrt(var + EPS)
    return x * inv[None, :, None, None] + (beta - mean * inv)[None, :, None, None]


def ref_forward(x, p, dilations, ksize=3):
    N, C, T, V = x.shape
    nb = len(dilations) + 2
    outs = []
    for i in range(nb):
        u = jnp.einsum('oi,nitv->notv', p['w1'][i], x) + p['b1'][i][None, :, None, None]
        u = _bn_ref(u, *p['bn1'][i])
        if i < nb - 1:
            u = jnp.maximum(u, 0.0)
        if i < len(dilations):
            d = dilations[i]
            up = jnp.pad(u, ((0, 0), (0, 0), (d, d), (0, 0)))
            y = sum(jnp.einsum('oi,nitv->notv', p['w2'][i][:, :, kk],
                               up[:, :, kk * d:kk * d + T, :]) for kk in range(ksize))
            y = _bn_ref(y + p['b2'][i][None, :, None, None], *p['bn2'][i])
        elif i == nb - 2:
            up = jnp.pad(u, ((0, 0), (0, 0), (1, 1), (0, 0)), constant_values=-jnp.inf)
            y = jnp.maximum(jnp.maximum(up[:, :, 0:T], up[:, :, 1:T + 1]), up[:, :, 2:T + 2])
            y = _bn_ref(y, *p['bn_pool'])
        else:
            y = u
        outs.append(y)
    out = jnp.concatenate(outs, axis=1) + x
    return jnp.maximum(out, 0.0)


if __name__ == "__main__":
    key = jax.random.PRNGKey(0)
    N, C, T, V = 2, 12, 16, 8          # (batch, channels, time, joints); 12 % 6 == 0
    dilations = [1, 2, 3, 4]

    params = init_params(key, C, C, dilations)
    x = jax.random.normal(jax.random.fold_in(key, 123), (N, C, T, V), jnp.float32)

    # nv_tile=8 -> grid of 2 steps over N*V, exercising the parallel pipeline.
    fwd = jax.jit(functools.partial(ms_tcn_forward, dilations=dilations, nv_tile=8))
    out = jax.block_until_ready(fwd(x, params))
    assert out.shape == (N, C, T, V)

    ref = ref_forward(x, params, dilations)
    max_err = float(jnp.max(jnp.abs(out - ref)))
    if not jnp.allclose(out, ref, atol=1e-4, rtol=1e-4):
        raise AssertionError(f"Pallas output mismatch vs reference, max |err| = {max_err}")
    print("KERNEL_OK")
</pallas_src>

<mosaic_0001>
module attributes {stable_mosaic.version = 11 : i64} {
  func.func @_ms_tcn_fused_kernel(%arg0: i32, %arg1: memref<16x8x12xf32, #tpu.memory_space<vmem>>, %arg2: memref<12x12xf32, #tpu.memory_space<vmem>>, %arg3: memref<1x12xf32, #tpu.memory_space<vmem>>, %arg4: memref<24x8xf32, #tpu.memory_space<vmem>>, %arg5: memref<1x8xf32, #tpu.memory_space<vmem>>, %arg6: memref<1x2xf32, #tpu.memory_space<vmem>>, %arg7: memref<1x2xf32, #tpu.memory_space<vmem>>, %arg8: memref<16x8x12xf32, #tpu.memory_space<vmem>>) attributes {dimension_semantics = [#tpu.dimension_semantics<parallel>], iteration_bounds = array<i64: 2>, scalar_prefetch = 0 : i64, scratch_operands = 0 : i64, tpu.core_type = #tpu.core_type<tc>, window_params = [{transform_indices = @transform_0, window_bounds = array<i64: 16, 8, 12>}, {pipeline_mode = #tpu.pipeline_mode<synchronous>, transform_indices = @transform_1, window_bounds = array<i64: 12, 12>}, {pipeline_mode = #tpu.pipeline_mode<synchronous>, transform_indices = @transform_2, window_bounds = array<i64: 1, 12>}, {pipeline_mode = #tpu.pipeline_mode<synchronous>, transform_indices = @transform_3, window_bounds = array<i64: 24, 8>}, {pipeline_mode = #tpu.pipeline_mode<synchronous>, transform_indices = @transform_4, window_bounds = array<i64: 1, 8>}, {pipeline_mode = #tpu.pipeline_mode<synchronous>, transform_indices = @transform_5, window_bounds = array<i64: 1, 2>}, {pipeline_mode = #tpu.pipeline_mode<synchronous>, transform_indices = @transform_6, window_bounds = array<i64: 1, 2>}, {transform_indices = @transform_7, window_bounds = array<i64: 16, 8, 12>}]} {
    %c0 = arith.constant 0 : index
    %c0_0 = arith.constant 0 : index
    %c0_1 = arith.constant 0 : index
    %0 = vector.load %arg1[%c0, %c0_0, %c0_1] : memref<16x8x12xf32, #tpu.memory_space<vmem>>, vector<16x8x12xf32>
    %1 = vector.shape_cast %0 : vector<16x8x12xf32> to vector<128x12xf32>
    %c0_2 = arith.constant 0 : index
    %c0_3 = arith.constant 0 : index
    %2 = vector.load %arg2[%c0_2, %c0_3] : memref<12x12xf32, #tpu.memory_space<vmem>>, vector<12x12xf32>
    %cst = arith.constant dense<0.000000e+00> : vector<128x12xf32>
    %3 = tpu.matmul %1, %2, %cst {dimension_numbers = #tpu.dot_dimension_numbers<[1], [0], [0], [1], [0, 0, 1, 1], [], []>} : vector<128x12xf32>, vector<12x12xf32>, vector<128x12xf32> -> vector<128x12xf32>
    %c0_4 = arith.constant 0 : index
    %c0_5 = arith.constant 0 : index
    %4 = vector.load %arg3[%c0_4, %c0_5] : memref<1x12xf32, #tpu.memory_space<vmem>>, vector<1x12xf32>
    %5 = vector.broadcast %4 : vector<1x12xf32> to vector<128x12xf32>
    %6 = arith.addf %3, %5 : vector<128x12xf32>
    %7 = vector.extract_strided_slice %6 {offsets = [0, 0], sizes = [128, 10], strides = [1, 1]} : vector<128x12xf32> to vector<128x10xf32>
    %cst_6 = arith.constant 0.000000e+00 : f32
    %8 = vector.broadcast %cst_6 : f32 to vector<128x10xf32>
    %9 = arith.maximumf %7, %8 : vector<128x10xf32>
    %10 = vector.extract_strided_slice %6 {offsets = [0, 10], sizes = [128, 2], strides = [1, 1]} : vector<128x12xf32> to vector<128x2xf32>
    %11 = vector.extract_strided_slice %9 {offsets = [0, 0], sizes = [128, 2], strides = [1, 1]} : vector<128x10xf32> to vector<128x2xf32>
    %cst_7 = arith.constant 0.000000e+00 : f32
    %12 = vector.broadcast %cst_7 : f32 to vector<8x2xf32>
    %13 = vector.extract_strided_slice %11 {offsets = [0, 0], sizes = [120, 2], strides = [1, 1]} : vector<128x2xf32> to vector<120x2xf32>
    %14 = tpu.concatenate %12, %13 in 0 : vector<8x2xf32>, vector<120x2xf32> -> vector<128x2xf32>
    %15 = vector.extract_strided_slice %9 {offsets = [0, 2], sizes = [128, 2], strides = [1, 1]} : vector<128x10xf32> to vector<128x2xf32>
    %cst_8 = arith.constant 0.000000e+00 : f32
    %16 = vector.broadcast %cst_8 : f32 to vector<16x2xf32>
    %17 = vector.extract_strided_slice %15 {offsets = [0, 0], sizes = [112, 2], strides = [1, 1]} : vector<128x2xf32> to vector<112x2xf32>
    %18 = tpu.concatenate %16, %17 in 0 : vector<16x2xf32>, vector<112x2xf32> -> vector<128x2xf32>
    %19 = vector.extract_strided_slice %9 {offsets = [0, 4], sizes = [128, 2], strides = [1, 1]} : vector<128x10xf32> to vector<128x2xf32>
    %cst_9 = arith.constant 0.000000e+00 : f32
    %20 = vector.broadcast %cst_9 : f32 to vector<24x2xf32>
    %21 = vector.extract_strided_slice %19 {offsets = [0, 0], sizes = [104, 2], strides = [1, 1]} : vector<128x2xf32> to vector<104x2xf32>
    %22 = tpu.concatenate %20, %21 in 0 : vector<24x2xf32>, vector<104x2xf32> -> vector<128x2xf32>
    %23 = vector.extract_strided_slice %9 {offsets = [0, 6], sizes = [128, 2], strides = [1, 1]} : vector<128x10xf32> to vector<128x2xf32>
    %cst_10 = arith.constant 0.000000e+00 : f32
    %24 = vector.broadcast %cst_10 : f32 to vector<32x2xf32>
    %25 = vector.extract_strided_slice %23 {offsets = [0, 0], sizes = [96, 2], strides = [1, 1]} : vector<128x2xf32> to vector<96x2xf32>
    %26 = tpu.concatenate %24, %25 in 0 : vector<32x2xf32>, vector<96x2xf32> -> vector<128x2xf32>
    %27 = vector.extract_strided_slice %9 {offsets = [0, 0], sizes = [128, 8], strides = [1, 1]} : vector<128x10xf32> to vector<128x8xf32>
    %28 = vector.extract_strided_slice %9 {offsets = [0, 0], sizes = [128, 2], strides = [1, 1]} : vector<128x10xf32> to vector<128x2xf32>
    %cst_11 = arith.constant 0.000000e+00 : f32
    %29 = vector.broadcast %cst_11 : f32 to vector<8x2xf32>
    %30 = vector.extract_strided_slice %28 {offsets = [8, 0], sizes = [120, 2], strides = [1, 1]} : vector<128x2xf32> to vector<120x2xf32>
    %31 = tpu.concatenate %30, %29 in 0 : vector<120x2xf32>, vector<8x2xf32> -> vector<128x2xf32>
    %32 = vector.extract_strided_slice %9 {offsets = [0, 2], sizes = [128, 2], strides = [1, 1]} : vector<128x10xf32> to vector<128x2xf32>
    %cst_12 = arith.constant 0.000000e+00 : f32
    %33 = vector.broadcast %cst_12 : f32 to vector<16x2xf32>
    %34 = vector.extract_strided_slice %32 {offsets = [16, 0], sizes = [112, 2], strides = [1, 1]} : vector<128x2xf32> to vector<112x2xf32>
    %35 = tpu.concatenate %34, %33 in 0 : vector<112x2xf32>, vector<16x2xf32> -> vector<128x2xf32>
    %36 = vector.extract_strided_slice %9 {offsets = [0, 4], sizes = [128, 2], strides = [1, 1]} : vector<128x10xf32> to vector<128x2xf32>
    %cst_13 = arith.constant 0.000000e+00 : f32
    %37 = vector.broadcast %cst_13 : f32 to vector<24x2xf32>
    %38 = vector.extract_strided_slice %36 {offsets = [24, 0], sizes = [104, 2], strides = [1, 1]} : vector<128x2xf32> to vector<104x2xf32>
    %39 = tpu.concatenate %38, %37 in 0 : vector<104x2xf32>, vector<24x2xf32> -> vector<128x2xf32>
    %40 = vector.extract_strided_slice %9 {offsets = [0, 6], sizes = [128, 2], strides = [1, 1]} : vector<128x10xf32> to vector<128x2xf32>
    %cst_14 = arith.constant 0.000000e+00 : f32
    %41 = vector.broadcast %cst_14 : f32 to vector<32x2xf32>
    %42 = vector.extract_strided_slice %40 {offsets = [32, 0], sizes = [96, 2], strides = [1, 1]} : vector<128x2xf32> to vector<96x2xf32>
    %43 = tpu.concatenate %42, %41 in 0 : vector<96x2xf32>, vector<32x2xf32> -> vector<128x2xf32>
    %44 = tpu.concatenate %14, %18, %22, %26, %27, %31, %35, %39, %43 in 1 : vector<128x2xf32>, vector<128x2xf32>, vector<128x2xf32>, vector<128x2xf32>, vector<128x8xf32>, vector<128x2xf32>, vector<128x2xf32>, vector<128x2xf32>, vector<128x2xf32> -> vector<128x24xf32>
    %c0_15 = arith.constant 0 : index
    %c0_16 = arith.constant 0 : index
    %45 = vector.load %arg4[%c0_15, %c0_16] : memref<24x8xf32, #tpu.memory_space<vmem>>, vector<24x8xf32>
    %cst_17 = arith.constant dense<0.000000e+00> : vector<128x8xf32>
    %46 = tpu.matmul %44, %45, %cst_17 {dimension_numbers = #tpu.dot_dimension_numbers<[1], [0], [0], [1], [0, 0, 1, 1], [], []>} : vector<128x24xf32>, vector<24x8xf32>, vector<128x8xf32> -> vector<128x8xf32>
    %c0_18 = arith.constant 0 : index
    %c0_19 = arith.constant 0 : index
    %47 = vector.load %arg5[%c0_18, %c0_19] : memref<1x8xf32, #tpu.memory_space<vmem>>, vector<1x8xf32>
    %48 = vector.broadcast %47 : vector<1x8xf32> to vector<128x8xf32>
    %49 = arith.addf %46, %48 : vector<128x8xf32>
    %50 = vector.extract_strided_slice %9 {offsets = [0, 8], sizes = [128, 2], strides = [1, 1]} : vector<128x10xf32> to vector<128x2xf32>
    %cst_20 = arith.constant 0.000000e+00 : f32
    %51 = vector.broadcast %cst_20 : f32 to vector<8x2xf32>
    %52 = vector.extract_strided_slice %50 {offsets = [0, 0], sizes = [120, 2], strides = [1, 1]} : vector<128x2xf32> to vector<120x2xf32>
    %53 = tpu.concatenate %51, %52 in 0 : vector<8x2xf32>, vector<120x2xf32> -> vector<128x2xf32>
    %54 = vector.extract_strided_slice %50 {offsets = [8, 0], sizes = [120, 2], strides = [1, 1]} : vector<128x2xf32> to vector<120x2xf32>
    %55 = tpu.concatenate %54, %51 in 0 : vector<120x2xf32>, vector<8x2xf32> -> vector<128x2xf32>
    %56 = arith.maximumf %53, %50 : vector<128x2xf32>
    %57 = arith.maximumf %56, %55 : vector<128x2xf32>
    %c0_21 = arith.constant 0 : index
    %c0_22 = arith.constant 0 : index
    %58 = vector.load %arg6[%c0_21, %c0_22] : memref<1x2xf32, #tpu.memory_space<vmem>>, vector<1x2xf32>
    %59 = vector.broadcast %58 : vector<1x2xf32> to vector<128x2xf32>
    %60 = arith.mulf %57, %59 : vector<128x2xf32>
    %c0_23 = arith.constant 0 : index
    %c0_24 = arith.constant 0 : index
    %61 = vector.load %arg7[%c0_23, %c0_24] : memref<1x2xf32, #tpu.memory_space<vmem>>, vector<1x2xf32>
    %62 = vector.broadcast %61 : vector<1x2xf32> to vector<128x2xf32>
    %63 = arith.addf %60, %62 : vector<128x2xf32>
    %64 = tpu.concatenate %49, %63, %10 in 1 : vector<128x8xf32>, vector<128x2xf32>, vector<128x2xf32> -> vector<128x12xf32>
    %65 = arith.addf %64, %1 : vector<128x12xf32>
    %cst_25 = arith.constant 0.000000e+00 : f32
    %66 = vector.broadcast %cst_25 : f32 to vector<128x12xf32>
    %67 = arith.maximumf %65, %66 : vector<128x12xf32>
    %68 = vector.shape_cast %67 : vector<128x12xf32> to vector<16x8x12xf32>
    %c0_26 = arith.constant 0 : index
    %c0_27 = arith.constant 0 : index
    %c0_28 = arith.constant 0 : index
    %69 = vector.load %arg8[%c0_26, %c0_27, %c0_28] : memref<16x8x12xf32, #tpu.memory_space<vmem>>, vector<16x8x12xf32>
    tpu.vector_store %arg8[%c0_26, %c0_27, %c0_28], %68 {strides = array<i32>} : memref<16x8x12xf32, #tpu.memory_space<vmem>>, vector<16x8x12xf32>,
    return
  }
  func.func @transform_0(%arg0: i32) -> (i32, i32, i32) {
    %c0_i32 = arith.constant 0 : i32
    %c0_i32_0 = arith.constant 0 : i32
    %c0_i32_1 = arith.constant 0 : i32
    return %c0_i32, %arg0, %c0_i32_0 : i32, i32, i32
  }
  func.func @transform_1(%arg0: i32) -> (i32, i32) {
    %c0_i32 = arith.constant 0 : i32
    %c0_i32_0 = arith.constant 0 : i32
    %c0_i32_1 = arith.constant 0 : i32
    return %c0_i32, %c0_i32_0 : i32, i32
  }
  func.func @transform_2(%arg0: i32) -> (i32, i32) {
    %c0_i32 = arith.constant 0 : i32
    %c0_i32_0 = arith.constant 0 : i32
    %c0_i32_1 = arith.constant 0 : i32
    return %c0_i32, %c0_i32_0 : i32, i32
  }
  func.func @transform_3(%arg0: i32) -> (i32, i32) {
    %c0_i32 = arith.constant 0 : i32
    %c0_i32_0 = arith.constant 0 : i32
    %c0_i32_1 = arith.constant 0 : i32
    return %c0_i32, %c0_i32_0 : i32, i32
  }
  func.func @transform_4(%arg0: i32) -> (i32, i32) {
    %c0_i32 = arith.constant 0 : i32
    %c0_i32_0 = arith.constant 0 : i32
    %c0_i32_1 = arith.constant 0 : i32
    return %c0_i32, %c0_i32_0 : i32, i32
  }
  func.func @transform_5(%arg0: i32) -> (i32, i32) {
    %c0_i32 = arith.constant 0 : i32
    %c0_i32_0 = arith.constant 0 : i32
    %c0_i32_1 = arith.constant 0 : i32
    return %c0_i32, %c0_i32_0 : i32, i32
  }
  func.func @transform_6(%arg0: i32) -> (i32, i32) {
    %c0_i32 = arith.constant 0 : i32
    %c0_i32_0 = arith.constant 0 : i32
    %c0_i32_1 = arith.constant 0 : i32
    return %c0_i32, %c0_i32_0 : i32, i32
  }
  func.func @transform_7(%arg0: i32) -> (i32, i32, i32) {
    %c0_i32 = arith.constant 0 : i32
    %c0_i32_0 = arith.constant 0 : i32
    %c0_i32_1 = arith.constant 0 : i32
    return %c0_i32, %arg0, %c0_i32_0 : i32, i32, i32
  }
}

</mosaic_0001>

<llo_original>
// kernel: ms_tcn_forward.1
$region0: #{ms_tcn_forward.1}
  #allocation0 [shape = 'u32[]', space=smem, size = 0x4, offset = 0x4, fixed_abs, tag = 'smem constant byte address 0x4 - core index']
  #allocation1 [shape = 'u32[144,128]{1,0:T(1,128)}', space=vmem, size = 0x12000, scoped, tag = 'internal scratch']
  %s0 = inlined_call_operand.vmem [shape: f32[16,16,12], index: 0, kind: input, shape index: {}]
  %s1 = inlined_call_operand.vmem [shape: f32[12,12], index: 1, kind: input, shape index: {}]
  %s2 = inlined_call_operand.vmem [shape: f32[1,12], index: 2, kind: input, shape index: {}]
  %s3 = inlined_call_operand.vmem [shape: f32[24,8], index: 3, kind: input, shape index: {}]
  %s4 = inlined_call_operand.vmem [shape: f32[1,8], index: 4, kind: input, shape index: {}]
  %s5 = inlined_call_operand.vmem [shape: f32[1,2], index: 5, kind: input, shape index: {}]
  %s6 = inlined_call_operand.vmem [shape: f32[1,2], index: 6, kind: input, shape index: {}]
  %s7 = inlined_call_operand.vmem [shape: f32[16,16,12], index: 7, kind: output, shape index: {}]
  %s8 = sld [smem:[#allocation0]]
  $region133: #{ms_tcn_forward.1} parent=0
    _
  %s10 = ssub.s32 1, %s8
  %s11 = scalar_select 0, %s10, %s8
  $region1: #{ms_tcn_forward.1} parent=0
    #allocation2 [shape = 'u8[131072]{0}', space=vmem, size = 0x20000, scoped, tag = 'input window, operand 0']
    #allocation3 [shape = 'u8[131072]{0}', space=vmem, size = 0x20000, scoped, tag = 'output window, operand 0']
    loop: start=0, step=1, limit=4
    $region2: #{ms_tcn_forward.1} parent=1 // loop_pre_header
      _
    $region3: #{ms_tcn_forward.1} parent=1 // loop_header
      %s13 = sphi 0, %s17
      %p14 = scmp.ge.s32.totalorder %s13, 4
      %s23 = sphi 0, %s25
      %s26 = sphi 0, %s23
      %s27 = sphi 0, %s26
      %s43 = sphi 0, %s27
      %s47 = sphi 0, %s47
      %s49 = sphi 0, %s47
      %s50 = sphi 0, %s49
      %s64 = sphi 0, %s50
      %s68 = sphi 0, %s68
      %s70 = sphi 0, %s68
      %s71 = sphi 0, %s70
      %s85 = sphi 0, %s71
      %s89 = sphi 0, %s89
      %s91 = sphi 0, %s89
      %s92 = sphi 0, %s91
      %s106 = sphi 0, %s92
      %s110 = sphi 0, %s110
      %s112 = sphi 0, %s110
      %s113 = sphi 0, %s112
      %s127 = sphi 0, %s113
      %s131 = sphi 0, %s131
      %s133 = sphi 0, %s131
      %s134 = sphi 0, %s133
      %s148 = sphi 0, %s134
      %s152 = sphi 0, %s152
      %s154 = sphi 0, %s152
      %s155 = sphi 0, %s154
      %s169 = sphi 0, %s155
      %s175 = sphi 0, %s177
      %s178 = sphi 0, %s175
      %s179 = sphi 0, %s178
      %s195 = sphi 0, %s179
    $region4: #{ms_tcn_forward.1} parent=1 // loop_header_branch
      %16 = sbr.rel (%p14) target = $region8
    $region5: #{ms_tcn_forward.1} parent=1 // loop_body
      %s18 = ssub.s32 %s13, 1
      %s19 = ssub.s32 %s13, 2
      %s20 = sadd.s32 %s13, 1
      %s21 = ssub.s32 %s13, %s20
      %p22 = scmp.eq.s32.totalorder %s21, 0
      %s24 = sadd.s32 %s23, 1
      %s25 = scalar_select %p22, %s23, %s24
      %p28 = pneg %p22
      %p29 = scmp.eq.s32.totalorder %s13, 1
      %p30 = por %p28, %p29
      %p31 = scmp.ne.s32.totalorder %s23, %s26
      %p32 = scmp.eq.s32.totalorder %s13, 0
      %p33 = por %p31, %p32
      %p34 = scmp.ne.s32.totalorder %s23, %s26
      %p35 = scmp.eq.s32.totalorder %s18, 1
      %p36 = por %p34, %p35
      %p37 = scmp.ne.s32.totalorder %s26, %s27
      %p38 = scmp.eq.s32.totalorder %s18, 0
      %p39 = por %p37, %p38
      %p40 = scmp.ne.s32.totalorder %s26, %s27
      %p41 = scmp.eq.s32.totalorder %s19, 1
      %p42 = por %p40, %p41
      %p44 = scmp.ne.s32.totalorder %s27, %s43
      %p45 = scmp.eq.s32.totalorder %s19, 0
      %p46 = por %p44, %p45
      %s48 = sadd.s32 %s47, 1
      %p51 = scmp.eq.s32.totalorder %s13, 1
      %p52 = scmp.ne.s32.totalorder %s47, %s49
      %p53 = scmp.eq.s32.totalorder %s13, 0
      %p54 = por %p52, %p53
      %p55 = scmp.ne.s32.totalorder %s47, %s49
      %p56 = scmp.eq.s32.totalorder %s18, 1
      %p57 = por %p55, %p56
      %p58 = scmp.ne.s32.totalorder %s49, %s50
      %p59 = scmp.eq.s32.totalorder %s18, 0
      %p60 = por %p58, %p59
      %p61 = scmp.ne.s32.totalorder %s49, %s50
      %p62 = scmp.eq.s32.totalorder %s19, 1
      %p63 = por %p61, %p62
      %p65 = scmp.ne.s32.totalorder %s50, %s64
      %p66 = scmp.eq.s32.totalorder %s19, 0
      %p67 = por %p65, %p66
      %s69 = sadd.s32 %s68, 1
      %p72 = scmp.eq.s32.totalorder %s13, 1
      %p73 = scmp.ne.s32.totalorder %s68, %s70
      %p74 = scmp.eq.s32.totalorder %s13, 0
      %p75 = por %p73, %p74
      %p76 = scmp.ne.s32.totalorder %s68, %s70
      %p77 = scmp.eq.s32.totalorder %s18, 1
      %p78 = por %p76, %p77
      %p79 = scmp.ne.s32.totalorder %s70, %s71
      %p80 = scmp.eq.s32.totalorder %s18, 0
      %p81 = por %p79, %p80
      %p82 = scmp.ne.s32.totalorder %s70, %s71
      %p83 = scmp.eq.s32.totalorder %s19, 1
      %p84 = por %p82, %p83
      %p86 = scmp.ne.s32.totalorder %s71, %s85
      %p87 = scmp.eq.s32.totalorder %s19, 0
      %p88 = por %p86, %p87
      %s90 = sadd.s32 %s89, 1
      %p93 = scmp.eq.s32.totalorder %s13, 1
      %p94 = scmp.ne.s32.totalorder %s89, %s91
      %p95 = scmp.eq.s32.totalorder %s13, 0
      %p96 = por %p94, %p95
      %p97 = scmp.ne.s32.totalorder %s89, %s91
      %p98 = scmp.eq.s32.totalorder %s18, 1
      %p99 = por %p97, %p98
      %p100 = scmp.ne.s32.totalorder %s91, %s92
      %p101 = scmp.eq.s32.totalorder %s18, 0
      %p102 = por %p100, %p101
      %p103 = scmp.ne.s32.totalorder %s91, %s92
      %p104 = scmp.eq.s32.totalorder %s19, 1
      %p105 = por %p103, %p104
      %p107 = scmp.ne.s32.totalorder %s92, %s106
      %p108 = scmp.eq.s32.totalorder %s19, 0
      %p109 = por %p107, %p108
      %s111 = sadd.s32 %s110, 1
      %p114 = scmp.eq.s32.totalorder %s13, 1
      %p115 = scmp.ne.s32.totalorder %s110, %s112
      %p116 = scmp.eq.s32.totalorder %s13, 0
      %p117 = por %p115, %p116
      %p118 = scmp.ne.s32.totalorder %s110, %s112
      %p119 = scmp.eq.s32.totalorder %s18, 1
      %p120 = por %p118, %p119
      %p121 = scmp.ne.s32.totalorder %s112, %s113
      %p122 = scmp.eq.s32.totalorder %s18, 0
      %p123 = por %p121, %p122
      %p124 = scmp.ne.s32.totalorder %s112, %s113
      %p125 = scmp.eq.s32.totalorder %s19, 1
      %p126 = por %p124, %p125
      %p128 = scmp.ne.s32.totalorder %s113, %s127
      %p129 = scmp.eq.s32.totalorder %s19, 0
      %p130 = por %p128, %p129
      %s132 = sadd.s32 %s131, 1
      %p135 = scmp.eq.s32.totalorder %s13, 1
      %p136 = scmp.ne.s32.totalorder %s131, %s133
      %p137 = scmp.eq.s32.totalorder %s13, 0
      %p138 = por %p136, %p137
      %p139 = scmp.ne.s32.totalorder %s131, %s133
      %p140 = scmp.eq.s32.totalorder %s18, 1
      %p141 = por %p139, %p140
      %p142 = scmp.ne.s32.totalorder %s133, %s134
      %p143 = scmp.eq.s32.totalorder %s18, 0
      %p144 = por %p142, %p143
      %p145 = scmp.ne.s32.totalorder %s133, %s134
      %p146 = scmp.eq.s32.totalorder %s19, 1
      %p147 = por %p145, %p146
      %p149 = scmp.ne.s32.totalorder %s134, %s148
      %p150 = scmp.eq.s32.totalorder %s19, 0
      %p151 = por %p149, %p150
      %s153 = sadd.s32 %s152, 1
      %p156 = scmp.eq.s32.totalorder %s13, 1
      %p157 = scmp.ne.s32.totalorder %s152, %s154
      %p158 = scmp.eq.s32.totalorder %s13, 0
      %p159 = por %p157, %p158
      %p160 = scmp.ne.s32.totalorder %s152, %s154
      %p161 = scmp.eq.s32.totalorder %s18, 1
      %p162 = por %p160, %p161
      %p163 = scmp.ne.s32.totalorder %s154, %s155
      %p164 = scmp.eq.s32.totalorder %s18, 0
      %p165 = por %p163, %p164
      %p166 = scmp.ne.s32.totalorder %s154, %s155
      %p167 = scmp.eq.s32.totalorder %s19, 1
      %p168 = por %p166, %p167
      %p170 = scmp.ne.s32.totalorder %s155, %s169
      %p171 = scmp.eq.s32.totalorder %s19, 0
      %p172 = por %p170, %p171
      %s173 = ssub.s32 %s13, %s20
      %p174 = scmp.eq.s32.totalorder %s173, 0
      %s176 = sadd.s32 %s175, 1
      %s177 = scalar_select %p174, %s175, %s176
      %p180 = pneg %p174
      %p181 = scmp.eq.s32.totalorder %s13, 1
      %p182 = por %p180, %p181
      %p183 = scmp.ne.s32.totalorder %s175, %s178
      %p184 = scmp.eq.s32.totalorder %s13, 0
      %p185 = por %p183, %p184
      %p186 = scmp.ne.s32.totalorder %s175, %s178
      %p187 = scmp.eq.s32.totalorder %s18, 1
      %p188 = por %p186, %p187
      %p189 = scmp.ne.s32.totalorder %s178, %s179
      %p190 = scmp.eq.s32.totalorder %s18, 0
      %p191 = por %p189, %p190
      %p192 = scmp.ne.s32.totalorder %s178, %s179
      %p193 = scmp.eq.s32.totalorder %s19, 1
      %p194 = por %p192, %p193
      %p196 = scmp.ne.s32.totalorder %s179, %s195
      %p197 = scmp.eq.s32.totalorder %s19, 0
      %p198 = por %p196, %p197
      %p199 = scmp.le.s32.totalorder 1, %s13
      %p200 = scmp.lt.s32.totalorder %s13, 3
      %p201 = pnand %p199, %p200
      %p202 = pneg %p201
      // Predicated region
      $region9: #{ms_tcn_forward.1} parent=5 // pred_check
        _
      $region10: #{ms_tcn_forward.1} parent=5 // pred_check_branch
        %204 = sbr.rel (%p201) target = $region12
      $region11: #{ms_tcn_forward.1} parent=5 // pred_region
        %s205 = ssub.s32 %s13, 1
        // Predicated region
        $region13: #{ms_tcn_forward.1} parent=11 // pred_check
          %p206 = pneg %p60
        $region14: #{ms_tcn_forward.1} parent=11 // pred_check_branch
          %208 = sbr.rel (%p206) target = $region16
        $region15: #{ms_tcn_forward.1} parent=11 // pred_region
          _
        $region16: #{ms_tcn_forward.1} parent=11 // pred_fallthru
          _
        // Predicated region
        $region17: #{ms_tcn_forward.1} parent=11 // pred_check
          %p209 = pneg %p81
        $region18: #{ms_tcn_forward.1} parent=11 // pred_check_branch
          %211 = sbr.rel (%p209) target = $region20
        $region19: #{ms_tcn_forward.1} parent=11 // pred_region
          _
        $region20: #{ms_tcn_forward.1} parent=11 // pred_fallthru
          _
        // Predicated region
        $region21: #{ms_tcn_forward.1} parent=11 // pred_check
          %p212 = pneg %p102
        $region22: #{ms_tcn_forward.1} parent=11 // pred_check_branch
          %214 = sbr.rel (%p212) target = $region24
        $region23: #{ms_tcn_forward.1} parent=11 // pred_region
          _
        $region24: #{ms_tcn_forward.1} parent=11 // pred_fallthru
          _
        // Predicated region
        $region25: #{ms_tcn_forward.1} parent=11 // pred_check
          %p215 = pneg %p123
        $region26: #{ms_tcn_forward.1} parent=11 // pred_check_branch
          %217 = sbr.rel (%p215) target = $region28
        $region27: #{ms_tcn_forward.1} parent=11 // pred_region
          _
        $region28: #{ms_tcn_forward.1} parent=11 // pred_fallthru
          _
        // Predicated region
        $region29: #{ms_tcn_forward.1} parent=11 // pred_check
          %p218 = pneg %p144
        $region30: #{ms_tcn_forward.1} parent=11 // pred_check_branch
          %220 = sbr.rel (%p218) target = $region32
        $region31: #{ms_tcn_forward.1} parent=11 // pred_region
          _
        $region32: #{ms_tcn_forward.1} parent=11 // pred_fallthru
          _
        // Predicated region
        $region33: #{ms_tcn_forward.1} parent=11 // pred_check
          %p221 = pneg %p165
        $region34: #{ms_tcn_forward.1} parent=11 // pred_check_branch
          %223 = sbr.rel (%p221) target = $region36
        $region35: #{ms_tcn_forward.1} parent=11 // pred_region
          _
        $region36: #{ms_tcn_forward.1} parent=11 // pred_fallthru
          _
      $region12: #{ms_tcn_forward.1} parent=5 // pred_fallthru
        _
      %p224 = scmp.lt.s32.totalorder %s13, 2
      // Predicated region
      $region37: #{ms_tcn_forward.1} parent=5 // pred_check
        %p225 = pneg %p224
      $region38: #{ms_tcn_forward.1} parent=5 // pred_check_branch
        %227 = sbr.rel (%p225) target = $region40
      $region39: #{ms_tcn_forward.1} parent=5 // pred_region
        // Predicated region
        $region41: #{ms_tcn_forward.1} parent=39 // pred_check
          %p228 = pneg %p33
        $region42: #{ms_tcn_forward.1} parent=39 // pred_check_branch
          %230 = sbr.rel (%p228) target = $region44
        $region43: #{ms_tcn_forward.1} parent=39 // pred_region
          %s231 = sand.u32 %s23, 1
          %s232 = sand.u32 %s23, 1
          %s233 = smul.addr %s232, 128
          %s234 = scalar_lea.vmem [#allocation2], %s233
          %s235 = smul.addr %s13, 8
          %s236 = scalar_lea.vmem %s0, %s235
          // Predicated region
          $region45: #{ms_tcn_forward.1} parent=43 // pred_check
            _
          $region46: #{ms_tcn_forward.1} parent=43 // pred_check_branch
            %238 = sbr.rel (0) target = $region48
          $region47: #{ms_tcn_forward.1} parent=43 // pred_region
            // Predicated region
            $region49: #{ms_tcn_forward.1} parent=47 // pred_check
              _
            $region50: #{ms_tcn_forward.1} parent=47 // pred_check_branch
              %240 = sbr.rel (0) target = $region52
            $region51: #{ms_tcn_forward.1} parent=47 // pred_region
              // Predicated region
              $region64: #{ms_tcn_forward.1} parent=51 // pred_check
                _
              $region65: #{ms_tcn_forward.1} parent=51 // pred_check_branch
                %285 = sbr.rel (0) target = $region67
              $region66: #{ms_tcn_forward.1} parent=51 // pred_region
                loop: start=0, step=1, limit=1
                $region68: #{ms_tcn_forward.1} parent=66 // loop_pre_header
                  _
                $region69: #{ms_tcn_forward.1} parent=66 // loop_header
                  %s287 = sphi 0, %s291
                  %p288 = scmp.ge.s32.totalorder %s287, 1
                  %s292 = sphi %s236, %s236
                  %s293 = sphi %s234, %s234
                $region70: #{ms_tcn_forward.1} parent=66 // loop_header_branch
                  %290 = sbr.rel (%p288) target = $region74
                $region71: #{ms_tcn_forward.1} parent=66 // loop_body
                  %v294 = vld [vmem:[%s292] sm:$0xff]
                  %295 = vst [vmem:[%s293] sm:$0xff] %v294
                  %v296 = vld [vmem:[%s292 + $0x10] sm:$0xff]
                  %297 = vst [vmem:[%s293 + $0x8] sm:$0xff] %v296
                  %v298 = vld [vmem:[%s292 + $0x20] sm:$0xff]
                  %299 = vst [vmem:[%s293 + $0x10] sm:$0xff] %v298
                  %v300 = vld [vmem:[%s292 + $0x30] sm:$0xff]
                  %301 = vst [vmem:[%s293 + $0x18] sm:$0xff] %v300
                  %v302 = vld [vmem:[%s292 + $0x40] sm:$0xff]
                  %303 = vst [vmem:[%s293 + $0x20] sm:$0xff] %v302
                  %v304 = vld [vmem:[%s292 + $0x50] sm:$0xff]
                  %305 = vst [vmem:[%s293 + $0x28] sm:$0xff] %v304
                  %v306 = vld [vmem:[%s292 + $0x60] sm:$0xff]
                  %307 = vst [vmem:[%s293 + $0x30] sm:$0xff] %v306
                  %v308 = vld [vmem:[%s292 + $0x70] sm:$0xff]
                  %309 = vst [vmem:[%s293 + $0x38] sm:$0xff] %v308
                  %v310 = vld [vmem:[%s292 + $0x80] sm:$0xff]
                  %311 = vst [vmem:[%s293 + $0x40] sm:$0xff] %v310
                  %v312 = vld [vmem:[%s292 + $0x90] sm:$0xff]
                  %313 = vst [vmem:[%s293 + $0x48] sm:$0xff] %v312
                  %v314 = vld [vmem:[%s292 + $0xa0] sm:$0xff]
                  %315 = vst [vmem:[%s293 + $0x50] sm:$0xff] %v314
                  %v316 = vld [vmem:[%s292 + $0xb0] sm:$0xff]
                  %317 = vst [vmem:[%s293 + $0x58] sm:$0xff] %v316
                  %v318 = vld [vmem:[%s292 + $0xc0] sm:$0xff]
                  %319 = vst [vmem:[%s293 + $0x60] sm:$0xff] %v318
                  %v320 = vld [vmem:[%s292 + $0xd0] sm:$0xff]
                  %321 = vst [vmem:[%s293 + $0x68] sm:$0xff] %v320
                  %v322 = vld [vmem:[%s292 + $0xe0] sm:$0xff]
                  %323 = vst [vmem:[%s293 + $0x70] sm:$0xff] %v322
                  %v324 = vld [vmem:[%s292 + $0xf0] sm:$0xff]
                  %325 = vst [vmem:[%s293 + $0x78] sm:$0xff] %v324
                $region72: #{ms_tcn_forward.1} parent=66 // loop_footer
                  %s291 = sadd.s32 1, %s287
                $region73: #{ms_tcn_forward.1} parent=66 // loop_footer_branch
                  %286 = sbr.rel target = $region69
                $region74: #{ms_tcn_forward.1} parent=66 // loop_exit
                  _
              $region67: #{ms_tcn_forward.1} parent=51 // pred_fallthru
                _
              // Predicated region
              $region75: #{ms_tcn_forward.1} parent=51 // pred_check
                _
              $region76: #{ms_tcn_forward.1} parent=51 // pred_check_branch
                %327 = sbr.rel target = $region78
              $region77: #{ms_tcn_forward.1} parent=51 // pred_region
                _
              $region78: #{ms_tcn_forward.1} parent=51 // pred_fallthru
                _
            $region52: #{ms_tcn_forward.1} parent=47 // pred_fallthru
              _
            // Predicated region
            $region53: #{ms_tcn_forward.1} parent=47 // pred_check
              _
            $region54: #{ms_tcn_forward.1} parent=47 // pred_check_branch
              %242 = sbr.rel target = $region56
            $region55: #{ms_tcn_forward.1} parent=47 // pred_region
              loop: start=0, step=1, limit=1
              $region57: #{ms_tcn_forward.1} parent=55 // loop_pre_header
                _
              $region58: #{ms_tcn_forward.1} parent=55 // loop_header
                %s245 = sphi 0, %s249
                %p246 = scmp.ge.s32.totalorder %s245, 1
                %s250 = sphi %s236, %s236
                %s251 = sphi %s234, %s234
              $region59: #{ms_tcn_forward.1} parent=55 // loop_header_branch
                %248 = sbr.rel (%p246) target = $region63
              $region60: #{ms_tcn_forward.1} parent=55 // loop_body
                %v252 = vld [vmem:[%s250] sm:$0xff]
                %253 = vst [vmem:[%s251] sm:$0xff] %v252
                %v254 = vld [vmem:[%s250 + $0x10] sm:$0xff]
                %255 = vst [vmem:[%s251 + $0x8] sm:$0xff] %v254
                %v256 = vld [vmem:[%s250 + $0x20] sm:$0xff]
                %257 = vst [vmem:[%s251 + $0x10] sm:$0xff] %v256
                %v258 = vld [vmem:[%s250 + $0x30] sm:$0xff]
                %259 = vst [vmem:[%s251 + $0x18] sm:$0xff] %v258
                %v260 = vld [vmem:[%s250 + $0x40] sm:$0xff]
                %261 = vst [vmem:[%s251 + $0x20] sm:$0xff] %v260
                %v262 = vld [vmem:[%s250 + $0x50] sm:$0xff]
                %263 = vst [vmem:[%s251 + $0x28] sm:$0xff] %v262
                %v264 = vld [vmem:[%s250 + $0x60] sm:$0xff]
                %265 = vst [vmem:[%s251 + $0x30] sm:$0xff] %v264
                %v266 = vld [vmem:[%s250 + $0x70] sm:$0xff]
                %267 = vst [vmem:[%s251 + $0x38] sm:$0xff] %v266
                %v268 = vld [vmem:[%s250 + $0x80] sm:$0xff]
                %269 = vst [vmem:[%s251 + $0x40] sm:$0xff] %v268
                %v270 = vld [vmem:[%s250 + $0x90] sm:$0xff]
                %271 = vst [vmem:[%s251 + $0x48] sm:$0xff] %v270
                %v272 = vld [vmem:[%s250 + $0xa0] sm:$0xff]
                %273 = vst [vmem:[%s251 + $0x50] sm:$0xff] %v272
                %v274 = vld [vmem:[%s250 + $0xb0] sm:$0xff]
                %275 = vst [vmem:[%s251 + $0x58] sm:$0xff] %v274
                %v276 = vld [vmem:[%s250 + $0xc0] sm:$0xff]
                %277 = vst [vmem:[%s251 + $0x60] sm:$0xff] %v276
                %v278 = vld [vmem:[%s250 + $0xd0] sm:$0xff]
                %279 = vst [vmem:[%s251 + $0x68] sm:$0xff] %v278
                %v280 = vld [vmem:[%s250 + $0xe0] sm:$0xff]
                %281 = vst [vmem:[%s251 + $0x70] sm:$0xff] %v280
                %v282 = vld [vmem:[%s250 + $0xf0] sm:$0xff]
                %283 = vst [vmem:[%s251 + $0x78] sm:$0xff] %v282
              $region61: #{ms_tcn_forward.1} parent=55 // loop_footer
                %s249 = sadd.s32 1, %s245
              $region62: #{ms_tcn_forward.1} parent=55 // loop_footer_branch
                %244 = sbr.rel target = $region58
              $region63: #{ms_tcn_forward.1} parent=55 // loop_exit
                _
            $region56: #{ms_tcn_forward.1} parent=47 // pred_fallthru
              _
          $region48: #{ms_tcn_forward.1} parent=43 // pred_fallthru
            _
          %328 = vnop
        $region44: #{ms_tcn_forward.1} parent=39 // pred_fallthru
          _
      $region40: #{ms_tcn_forward.1} parent=5 // pred_fallthru
        _
      %p329 = scmp.le.s32.totalorder 1, %s13
      %p330 = scmp.lt.s32.totalorder %s13, 3
      %p331 = pnand %p329, %p330
      %p332 = pneg %p331
      // Predicated region
      $region79: #{ms_tcn_forward.1} parent=5 // pred_check
        _
      $region80: #{ms_tcn_forward.1} parent=5 // pred_check_branch
        %334 = sbr.rel (%p331) target = $region82
      $region81: #{ms_tcn_forward.1} parent=5 // pred_region
        %s335 = ssub.s32 %s13, 1
        %s336 = sand.u32 %s26, 1
        %s337 = sand.u32 %s26, 1
        %s338 = smul.addr %s337, 128
        %s339 = scalar_lea.vmem [#allocation2], %s338
        // Predicated region
        $region83: #{ms_tcn_forward.1} parent=81 // pred_check
          %p340 = pneg %p39
        $region84: #{ms_tcn_forward.1} parent=81 // pred_check_branch
          %342 = sbr.rel (%p340) target = $region86
        $region85: #{ms_tcn_forward.1} parent=81 // pred_region
          _
        $region86: #{ms_tcn_forward.1} parent=81 // pred_fallthru
          _
        %s343 = sand.u32 %s26, 1
        %s344 = sand.u32 %s26, 1
        %s345 = smul.addr %s344, 128
        %s346 = scalar_lea.vmem [#allocation2], %s345
        %p347 = pneg %p39
        %p348 = pneg %p36
        %p349 = pneg %p60
        %p350 = pneg %p57
        %p351 = pneg %p81
        %p352 = pneg %p78
        %p353 = pneg %p102
        %p354 = pneg %p99
        %p355 = pneg %p123
        %p356 = pneg %p120
        %p357 = pneg %p144
        %p358 = pneg %p141
        %p359 = pneg %p165
        %p360 = pneg %p162
        %p361 = pneg %p191
        %p362 = pneg %p188
        %s363 = sand.u32 %s178, 1
        %s364 = sand.u32 %s178, 1
        %s365 = smul.addr %s364, 128
        %s366 = scalar_lea.vmem [#allocation3], %s365
        %v367 = vld [vmem:[%s339] sm:$0xff]
        %v368 = vld [vmem:[%s339 + $0x8] sm:$0xff]
        %v369 = vld [vmem:[%s339 + $0x10] sm:$0xff]
        %v370 = vld [vmem:[%s339 + $0x18] sm:$0xff]
        %v371 = vld [vmem:[%s339 + $0x20] sm:$0xff]
        %v372 = vld [vmem:[%s339 + $0x28] sm:$0xff]
        %v373 = vld [vmem:[%s339 + $0x30] sm:$0xff]
        %v374 = vld [vmem:[%s339 + $0x38] sm:$0xff]
        %v375 = vld [vmem:[%s339 + $0x40] sm:$0xff]
        %v376 = vld [vmem:[%s339 + $0x48] sm:$0xff]
        %v377 = vld [vmem:[%s339 + $0x50] sm:$0xff]
        %v378 = vld [vmem:[%s339 + $0x58] sm:$0xff]
        %v379 = vld [vmem:[%s339 + $0x60] sm:$0xff]
        %v380 = vld [vmem:[%s339 + $0x68] sm:$0xff]
        %v381 = vld [vmem:[%s339 + $0x70] sm:$0xff]
        %v382 = vld [vmem:[%s339 + $0x78] sm:$0xff]
        %v383 = vld [vmem:[%s1] sm:$0xff]
        %v384 = vld [vmem:[%s1 + $0x8] sm:$0xf]
        %v385 = vld [vmem:[%s2] sm:$0x1]
        %v387 = vlaneseq
        %v388 = vshrl.u32 %v387, 7
        %v389 = vsub.s32 0, %v388
        %v390 = vrot.slane %v385, %v389
        %vm392 = vcmask 97280
        %v394 = vsel %vm392, %v367, 0
        %v397 = vsel %vm392, %v368, 0
        %v400 = vsel %vm392, %v369, 0
        %v403 = vsel %vm392, %v370, 0
        %v406 = vsel %vm392, %v371, 0
        %v409 = vsel %vm392, %v372, 0
        %v412 = vsel %vm392, %v373, 0
        %v415 = vsel %vm392, %v374, 0
        %v418 = vsel %vm392, %v375, 0
        %v421 = vsel %vm392, %v376, 0
        %v424 = vsel %vm392, %v377, 0
        %v427 = vsel %vm392, %v378, 0
        %v430 = vsel %vm392, %v379, 0
        %v433 = vsel %vm392, %v380, 0
        %v436 = vsel %vm392, %v381, 0
        %v439 = vsel %vm392, %v382, 0
        %vm441 = vcmask 1043456
        %v443 = vsel %vm441, %v384, 0
        %445 = vmatprep.subr.mxu0 0.0
        %446 = vmatpush1.msra.mxu0 %v383
        %447 = vmatprep.subr.mxu0 0.0
        %448 = vmatpush1.msra.mxu0 %v443
        %449 = vmatprep.subr.mxu0 0.0
        %450 = vmatpush1.msra.mxu0 0.0
        %451 = vmatprep.subr.mxu0 0.0
        %452 = vmatpush1.msra.mxu0 0.0
        %453 = vmatprep.subr.mxu0 0.0
        %454 = vmatpush1.msra.mxu0 0.0
        %455 = vmatprep.subr.mxu0 0.0
        %456 = vmatpush1.msra.mxu0 0.0
        %457 = vmatprep.subr.mxu0 0.0
        %458 = vmatpush1.msra.mxu0 0.0
        %459 = vmatprep.subr.mxu0 0.0
        %460 = vmatpush1.msra.mxu0 0.0
        %461 = vmatprep.subr.mxu0 0.0
        %462 = vmatpush1.msra.mxu0 0.0
        %463 = vmatprep.subr.mxu0 0.0
        %464 = vmatpush1.msra.mxu0 0.0
        %465 = vmatprep.subr.mxu0 0.0
        %466 = vmatpush1.msra.mxu0 0.0
        %467 = vmatprep.subr.mxu0 0.0
        %468 = vmatpush1.msra.mxu0 0.0
        %469 = vmatprep.subr.mxu0 0.0
        %470 = vmatpush1.msra.mxu0 0.0
        %471 = vmatprep.subr.mxu0 0.0
        %472 = vmatpush1.msra.mxu0 0.0
        %473 = vmatprep.subr.mxu0 0.0
        %474 = vmatpush1.msra.mxu0 0.0
        %475 = vmatprep.subr.mxu0 0.0
        %476 = vmatpush1.msra.mxu0 0.0
        %477 = vmatprep.subr.mxu0 0.0
        %478 = vmatpush1.msra.mxu0 0.0
        %479 = vmatprep.subr.mxu0 0.0
        %480 = vmatpush1.msra.mxu0 0.0
        %481 = vmatprep.subr.mxu0 0.0
        %482 = vmatpush1.msra.mxu0 0.0
        %483 = vmatprep.subr.mxu0 0.0
        %484 = vmatpush1.msra.mxu0 0.0
        %485 = vmatprep.subr.mxu0 0.0
        %486 = vmatpush1.msra.mxu0 0.0
        %487 = vmatprep.subr.mxu0 0.0
        %488 = vmatpush1.msra.mxu0 0.0
        %489 = vmatprep.subr.mxu0 0.0
        %490 = vmatpush1.msra.mxu0 0.0
        %491 = vmatprep.subr.mxu0 0.0
        %492 = vmatpush1.msra.mxu0 0.0
        %493 = vmatprep.subr.mxu0 0.0
        %494 = vmatpush1.msra.mxu0 0.0
        %495 = vmatprep.subr.mxu0 0.0
        %496 = vmatpush1.msra.mxu0 0.0
        %497 = vmatprep.subr.mxu0 0.0
        %498 = vmatpush1.msra.mxu0 0.0
        %499 = vmatprep.subr.mxu0 0.0
        %500 = vmatpush1.msra.mxu0 0.0
        %501 = vmatprep.subr.mxu0 0.0
        %502 = vmatpush1.msra.mxu0 0.0
        %503 = vmatprep.subr.mxu0 0.0
        %504 = vmatpush1.msra.mxu0 0.0
        %505 = vmatprep.subr.mxu0 0.0
        %506 = vmatpush1.msra.mxu0 0.0
        %507 = vmatprep.subr.mxu0 0.0
        %508 = vmatpush1.msra.mxu0 0.0
        %509 = vmatprep.mubr.f32.mxu0 0.0
        %510 = vmatmul.mubr.f32.gmra.mrb[0].mxu0 %v394
        %v511 = vpop.f32.mrb[0].mxu0
        %v512 = vadd.f32 %v390, %v511
        %v513 = vpop.f32.mrb[0].mxu0
        %514 = vmatprep.mubr.f32.mxu0 0.0
        %515 = vmatmul.mubr.f32.gmra.mrb[0].mxu0 %v397
        %v516 = vpop.f32.mrb[0].mxu0
        %v517 = vadd.f32 %v390, %v516
        %v518 = vpop.f32.mrb[0].mxu0
        %519 = vmatprep.mubr.f32.mxu0 0.0
        %520 = vmatmul.mubr.f32.gmra.mrb[0].mxu0 %v400
        %v521 = vpop.f32.mrb[0].mxu0
        %v522 = vadd.f32 %v390, %v521
        %v523 = vpop.f32.mrb[0].mxu0
        %524 = vmatprep.mubr.f32.mxu0 0.0
        %525 = vmatmul.mubr.f32.gmra.mrb[0].mxu0 %v403
        %v526 = vpop.f32.mrb[0].mxu0
        %v527 = vadd.f32 %v390, %v526
        %v528 = vpop.f32.mrb[0].mxu0
        %529 = vmatprep.mubr.f32.mxu0 0.0
        %530 = vmatmul.mubr.f32.gmra.mrb[0].mxu0 %v406
        %v531 = vpop.f32.mrb[0].mxu0
        %v532 = vadd.f32 %v390, %v531
        %v533 = vpop.f32.mrb[0].mxu0
        %534 = vmatprep.mubr.f32.mxu0 0.0
        %535 = vmatmul.mubr.f32.gmra.mrb[0].mxu0 %v409
        %v536 = vpop.f32.mrb[0].mxu0
        %v537 = vadd.f32 %v390, %v536
        %v538 = vpop.f32.mrb[0].mxu0
        %539 = vmatprep.mubr.f32.mxu0 0.0
        %540 = vmatmul.mubr.f32.gmra.mrb[0].mxu0 %v412
        %v541 = vpop.f32.mrb[0].mxu0
        %v542 = vadd.f32 %v390, %v541
        %v543 = vpop.f32.mrb[0].mxu0
        %544 = vmatprep.mubr.f32.mxu0 0.0
        %545 = vmatmul.mubr.f32.gmra.mrb[0].mxu0 %v415
        %v546 = vpop.f32.mrb[0].mxu0
        %v547 = vadd.f32 %v390, %v546
        %v548 = vpop.f32.mrb[0].mxu0
        %549 = vmatprep.mubr.f32.mxu0 0.0
        %550 = vmatmul.mubr.f32.gmra.mrb[0].mxu0 %v418
        %v551 = vpop.f32.mrb[0].mxu0
        %v552 = vadd.f32 %v390, %v551
        %v553 = vpop.f32.mrb[0].mxu0
        %554 = vmatprep.mubr.f32.mxu0 0.0
        %555 = vmatmul.mubr.f32.gmra.mrb[0].mxu0 %v421
        %v556 = vpop.f32.mrb[0].mxu0
        %v557 = vadd.f32 %v390, %v556
        %v558 = vpop.f32.mrb[0].mxu0
        %559 = vmatprep.mubr.f32.mxu0 0.0
        %560 = vmatmul.mubr.f32.gmra.mrb[0].mxu0 %v424
        %v561 = vpop.f32.mrb[0].mxu0
        %v562 = vadd.f32 %v390, %v561
        %v563 = vpop.f32.mrb[0].mxu0
        %564 = vmatprep.mubr.f32.mxu0 0.0
        %565 = vmatmul.mubr.f32.gmra.mrb[0].mxu0 %v427
        %v566 = vpop.f32.mrb[0].mxu0
        %v567 = vadd.f32 %v390, %v566
        %v568 = vpop.f32.mrb[0].mxu0
        %569 = vmatprep.mubr.f32.mxu0 0.0
        %570 = vmatmul.mubr.f32.gmra.mrb[0].mxu0 %v430
        %v571 = vpop.f32.mrb[0].mxu0
        %v572 = vadd.f32 %v390, %v571
        %v573 = vpop.f32.mrb[0].mxu0
        %574 = vmatprep.mubr.f32.mxu0 0.0
        %575 = vmatmul.mubr.f32.gmra.mrb[0].mxu0 %v433
        %v576 = vpop.f32.mrb[0].mxu0
        %v577 = vadd.f32 %v390, %v576
        %v578 = vpop.f32.mrb[0].mxu0
        %579 = vmatprep.mubr.f32.mxu0 0.0
        %580 = vmatmul.mubr.f32.gmra.mrb[0].mxu0 %v436
        %v581 = vpop.f32.mrb[0].mxu0
        %v582 = vadd.f32 %v390, %v581
        %v583 = vpop.f32.mrb[0].mxu0
        %584 = vmatprep.mubr.f32.mxu0 0.0
        %585 = vmatmul.mubr.f32.gmra.mrb[0].mxu0 %v439
        %v586 = vpop.f32.mrb[0].mxu0
        %v587 = vadd.f32 %v390, %v586
        %v588 = vpop.f32.mrb[0].mxu0
        %589 = vdwg.mxu0
        %v590 = vmax.f32 %v512, 0.0
        %v591 = vmax.f32 %v517, 0.0
        %v592 = vmax.f32 %v522, 0.0
        %v593 = vmax.f32 %v527, 0.0
        %v594 = vmax.f32 %v532, 0.0
        %v595 = vmax.f32 %v537, 0.0
        %v596 = vmax.f32 %v542, 0.0
        %v597 = vmax.f32 %v547, 0.0
        %v598 = vmax.f32 %v552, 0.0
        %v599 = vmax.f32 %v557, 0.0
        %v600 = vmax.f32 %v562, 0.0
        %v601 = vmax.f32 %v567, 0.0
        %v602 = vmax.f32 %v572, 0.0
        %v603 = vmax.f32 %v577, 0.0
        %v604 = vmax.f32 %v582, 0.0
        %v605 = vmax.f32 %v587, 0.0
        %620 = vrot.lane.b32.xlu0 %v590, 126
        %v621 = vpop.permute.xlu0 %620
        %622 = vrot.lane.b32.xlu0 %v591, 126
        %v623 = vpop.permute.xlu0 %622
        %624 = vrot.lane.b32.xlu0 %v592, 126
        %v625 = vpop.permute.xlu0 %624
        %626 = vrot.lane.b32.xlu0 %v593, 126
        %v627 = vpop.permute.xlu0 %626
        %628 = vrot.lane.b32.xlu0 %v594, 126
        %v629 = vpop.permute.xlu0 %628
        %630 = vrot.lane.b32.xlu0 %v595, 126
        %v631 = vpop.permute.xlu0 %630
        %632 = vrot.lane.b32.xlu0 %v596, 126
        %v633 = vpop.permute.xlu0 %632
        %634 = vrot.lane.b32.xlu0 %v597, 126
        %v635 = vpop.permute.xlu0 %634
        %636 = vrot.lane.b32.xlu0 %v598, 126
        %v637 = vpop.permute.xlu0 %636
        %638 = vrot.lane.b32.xlu0 %v599, 126
        %v639 = vpop.permute.xlu0 %638
        %640 = vrot.lane.b32.xlu0 %v600, 126
        %v641 = vpop.permute.xlu0 %640
        %642 = vrot.lane.b32.xlu0 %v601, 126
        %v643 = vpop.permute.xlu0 %642
        %644 = vrot.lane.b32.xlu0 %v602, 126
        %v645 = vpop.permute.xlu0 %644
        %646 = vrot.lane.b32.xlu0 %v603, 126
        %v647 = vpop.permute.xlu0 %646
        %648 = vrot.lane.b32.xlu0 %v590, 124
        %v649 = vpop.permute.xlu0 %648
        %650 = vrot.lane.b32.xlu0 %v591, 124
        %v651 = vpop.permute.xlu0 %650
        %652 = vrot.lane.b32.xlu0 %v592, 124
        %v653 = vpop.permute.xlu0 %652
        %654 = vrot.lane.b32.xlu0 %v593, 124
        %v655 = vpop.permute.xlu0 %654
        %656 = vrot.lane.b32.xlu0 %v594, 124
        %v657 = vpop.permute.xlu0 %656
        %658 = vrot.lane.b32.xlu0 %v595, 124
        %v659 = vpop.permute.xlu0 %658
        %660 = vrot.lane.b32.xlu0 %v596, 124
        %v661 = vpop.permute.xlu0 %660
        %662 = vrot.lane.b32.xlu0 %v597, 124
        %v663 = vpop.permute.xlu0 %662
        %664 = vrot.lane.b32.xlu0 %v598, 124
        %v665 = vpop.permute.xlu0 %664
        %666 = vrot.lane.b32.xlu0 %v599, 124
        %v667 = vpop.permute.xlu0 %666
        %668 = vrot.lane.b32.xlu0 %v600, 124
        %v669 = vpop.permute.xlu0 %668
        %670 = vrot.lane.b32.xlu0 %v601, 124
        %v671 = vpop.permute.xlu0 %670
        %672 = vrot.lane.b32.xlu0 %v602, 124
        %v673 = vpop.permute.xlu0 %672
        %674 = vrot.lane.b32.xlu0 %v590, 122
        %v675 = vpop.permute.xlu0 %674
        %676 = vrot.lane.b32.xlu0 %v591, 122
        %v677 = vpop.permute.xlu0 %676
        %678 = vrot.lane.b32.xlu0 %v592, 122
        %v679 = vpop.permute.xlu0 %678
        %680 = vrot.lane.b32.xlu0 %v593, 122
        %v681 = vpop.permute.xlu0 %680
        %682 = vrot.lane.b32.xlu0 %v594, 122
        %v683 = vpop.permute.xlu0 %682
        %684 = vrot.lane.b32.xlu0 %v595, 122
        %v685 = vpop.permute.xlu0 %684
        %686 = vrot.lane.b32.xlu0 %v596, 122
        %v687 = vpop.permute.xlu0 %686
        %688 = vrot.lane.b32.xlu0 %v597, 122
        %v689 = vpop.permute.xlu0 %688
        %690 = vrot.lane.b32.xlu0 %v598, 122
        %v691 = vpop.permute.xlu0 %690
        %692 = vrot.lane.b32.xlu0 %v599, 122
        %v693 = vpop.permute.xlu0 %692
        %694 = vrot.lane.b32.xlu0 %v600, 122
        %v695 = vpop.permute.xlu0 %694
        %696 = vrot.lane.b32.xlu0 %v601, 122
        %v697 = vpop.permute.xlu0 %696
        %699 = vrot.lane.b32.xlu0 0.0, 2
        %v700 = vpop.permute.xlu0 %699
        %701 = vrot.lane.b32.xlu0 %v621, 2
        %v702 = vpop.permute.xlu0 %701
        %703 = vrot.lane.b32.xlu0 %v623, 2
        %v704 = vpop.permute.xlu0 %703
        %705 = vrot.lane.b32.xlu0 %v625, 2
        %v706 = vpop.permute.xlu0 %705
        %707 = vrot.lane.b32.xlu0 %v627, 2
        %v708 = vpop.permute.xlu0 %707
        %709 = vrot.lane.b32.xlu0 %v629, 2
        %v710 = vpop.permute.xlu0 %709
        %711 = vrot.lane.b32.xlu0 %v631, 2
        %v712 = vpop.permute.xlu0 %711
        %713 = vrot.lane.b32.xlu0 %v633, 2
        %v714 = vpop.permute.xlu0 %713
        %715 = vrot.lane.b32.xlu0 %v635, 2
        %v716 = vpop.permute.xlu0 %715
        %717 = vrot.lane.b32.xlu0 %v637, 2
        %v718 = vpop.permute.xlu0 %717
        %719 = vrot.lane.b32.xlu0 %v639, 2
        %v720 = vpop.permute.xlu0 %719
        %721 = vrot.lane.b32.xlu0 %v641, 2
        %v722 = vpop.permute.xlu0 %721
        %723 = vrot.lane.b32.xlu0 %v643, 2
        %v724 = vpop.permute.xlu0 %723
        %725 = vrot.lane.b32.xlu0 %v645, 2
        %v726 = vpop.permute.xlu0 %725
        %727 = vrot.lane.b32.xlu0 %v647, 2
        %v728 = vpop.permute.xlu0 %727
        %744 = vrot.lane.b32.xlu0 0.0, 4
        %v745 = vpop.permute.xlu0 %744
        %746 = vrot.lane.b32.xlu0 %v649, 4
        %v747 = vpop.permute.xlu0 %746
        %748 = vrot.lane.b32.xlu0 %v651, 4
        %v749 = vpop.permute.xlu0 %748
        %750 = vrot.lane.b32.xlu0 %v653, 4
        %v751 = vpop.permute.xlu0 %750
        %752 = vrot.lane.b32.xlu0 %v655, 4
        %v753 = vpop.permute.xlu0 %752
        %754 = vrot.lane.b32.xlu0 %v657, 4
        %v755 = vpop.permute.xlu0 %754
        %756 = vrot.lane.b32.xlu0 %v659, 4
        %v757 = vpop.permute.xlu0 %756
        %758 = vrot.lane.b32.xlu0 %v661, 4
        %v759 = vpop.permute.xlu0 %758
        %760 = vrot.lane.b32.xlu0 %v663, 4
        %v761 = vpop.permute.xlu0 %760
        %762 = vrot.lane.b32.xlu0 %v665, 4
        %v763 = vpop.permute.xlu0 %762
        %764 = vrot.lane.b32.xlu0 %v667, 4
        %v765 = vpop.permute.xlu0 %764
        %766 = vrot.lane.b32.xlu0 %v669, 4
        %v767 = vpop.permute.xlu0 %766
        %768 = vrot.lane.b32.xlu0 %v671, 4
        %v769 = vpop.permute.xlu0 %768
        %770 = vrot.lane.b32.xlu0 %v673, 4
        %v771 = vpop.permute.xlu0 %770
        %786 = vrot.lane.b32.xlu0 0.0, 6
        %v787 = vpop.permute.xlu0 %786
        %788 = vrot.lane.b32.xlu0 %v675, 6
        %v789 = vpop.permute.xlu0 %788
        %790 = vrot.lane.b32.xlu0 %v677, 6
        %v791 = vpop.permute.xlu0 %790
        %792 = vrot.lane.b32.xlu0 %v679, 6
        %v793 = vpop.permute.xlu0 %792
        %794 = vrot.lane.b32.xlu0 %v681, 6
        %v795 = vpop.permute.xlu0 %794
        %796 = vrot.lane.b32.xlu0 %v683, 6
        %v797 = vpop.permute.xlu0 %796
        %798 = vrot.lane.b32.xlu0 %v685, 6
        %v799 = vpop.permute.xlu0 %798
        %800 = vrot.lane.b32.xlu0 %v687, 6
        %v801 = vpop.permute.xlu0 %800
        %802 = vrot.lane.b32.xlu0 %v689, 6
        %v803 = vpop.permute.xlu0 %802
        %804 = vrot.lane.b32.xlu0 %v691, 6
        %v805 = vpop.permute.xlu0 %804
        %806 = vrot.lane.b32.xlu0 %v693, 6
        %v807 = vpop.permute.xlu0 %806
        %808 = vrot.lane.b32.xlu0 %v695, 6
        %v809 = vpop.permute.xlu0 %808
        %810 = vrot.lane.b32.xlu0 %v697, 6
        %v811 = vpop.permute.xlu0 %810
        %827 = vrot.lane.b32.xlu0 %v590, 8
        %v828 = vpop.permute.xlu0 %827
        %829 = vrot.lane.b32.xlu0 %v591, 8
        %v830 = vpop.permute.xlu0 %829
        %831 = vrot.lane.b32.xlu0 %v592, 8
        %v832 = vpop.permute.xlu0 %831
        %833 = vrot.lane.b32.xlu0 %v593, 8
        %v834 = vpop.permute.xlu0 %833
        %835 = vrot.lane.b32.xlu0 %v594, 8
        %v836 = vpop.permute.xlu0 %835
        %837 = vrot.lane.b32.xlu0 %v595, 8
        %v838 = vpop.permute.xlu0 %837
        %839 = vrot.lane.b32.xlu0 %v596, 8
        %v840 = vpop.permute.xlu0 %839
        %841 = vrot.lane.b32.xlu0 %v597, 8
        %v842 = vpop.permute.xlu0 %841
        %843 = vrot.lane.b32.xlu0 %v598, 8
        %v844 = vpop.permute.xlu0 %843
        %845 = vrot.lane.b32.xlu0 %v599, 8
        %v846 = vpop.permute.xlu0 %845
        %847 = vrot.lane.b32.xlu0 %v600, 8
        %v848 = vpop.permute.xlu0 %847
        %849 = vrot.lane.b32.xlu0 %v601, 8
        %v850 = vpop.permute.xlu0 %849
        %851 = vrot.lane.b32.xlu0 %v602, 8
        %v852 = vpop.permute.xlu0 %851
        %853 = vrot.lane.b32.xlu0 %v603, 8
        %v854 = vpop.permute.xlu0 %853
        %855 = vrot.lane.b32.xlu0 %v604, 8
        %v856 = vpop.permute.xlu0 %855
        %857 = vrot.lane.b32.xlu0 %v605, 8
        %v858 = vpop.permute.xlu0 %857
        %875 = vrot.lane.b32.xlu0 %v591, 16
        %v876 = vpop.permute.xlu0 %875
        %877 = vrot.lane.b32.xlu0 %v592, 16
        %v878 = vpop.permute.xlu0 %877
        %879 = vrot.lane.b32.xlu0 %v593, 16
        %v880 = vpop.permute.xlu0 %879
        %881 = vrot.lane.b32.xlu0 %v594, 16
        %v882 = vpop.permute.xlu0 %881
        %883 = vrot.lane.b32.xlu0 %v595, 16
        %v884 = vpop.permute.xlu0 %883
        %885 = vrot.lane.b32.xlu0 %v596, 16
        %v886 = vpop.permute.xlu0 %885
        %887 = vrot.lane.b32.xlu0 %v597, 16
        %v888 = vpop.permute.xlu0 %887
        %889 = vrot.lane.b32.xlu0 %v598, 16
        %v890 = vpop.permute.xlu0 %889
        %891 = vrot.lane.b32.xlu0 %v599, 16
        %v892 = vpop.permute.xlu0 %891
        %893 = vrot.lane.b32.xlu0 %v600, 16
        %v894 = vpop.permute.xlu0 %893
        %895 = vrot.lane.b32.xlu0 %v601, 16
        %v896 = vpop.permute.xlu0 %895
        %897 = vrot.lane.b32.xlu0 %v602, 16
        %v898 = vpop.permute.xlu0 %897
        %899 = vrot.lane.b32.xlu0 %v603, 16
        %v900 = vpop.permute.xlu0 %899
        %901 = vrot.lane.b32.xlu0 %v604, 16
        %v902 = vpop.permute.xlu0 %901
        %903 = vrot.lane.b32.xlu0 %v605, 16
        %v904 = vpop.permute.xlu0 %903
        %905 = vrot.lane.b32.xlu0 0.0, 16
        %v906 = vpop.permute.xlu0 %905
        %vm923 = vcmask 15360
        %v924 = vsel %vm923, 0.0, %v700
        %v925 = vsel %vm923, %v590, %v700
        %v926 = vsel %vm923, %v591, %v702
        %v927 = vsel %vm923, %v592, %v704
        %v928 = vsel %vm923, %v593, %v706
        %v929 = vsel %vm923, %v594, %v708
        %v930 = vsel %vm923, %v595, %v710
        %v931 = vsel %vm923, %v596, %v712
        %v932 = vsel %vm923, %v597, %v714
        %v933 = vsel %vm923, %v598, %v716
        %v934 = vsel %vm923, %v599, %v718
        %v935 = vsel %vm923, %v600, %v720
        %v936 = vsel %vm923, %v601, %v722
        %v937 = vsel %vm923, %v602, %v724
        %v938 = vsel %vm923, %v603, %v726
        %v939 = vsel %vm923, %v604, %v728
        %vm940 = vcmask 31744
        %v941 = vsel %vm940, %v924, %v745
        %v942 = vsel %vm940, %v925, %v745
        %v943 = vsel %vm940, %v926, %v745
        %v944 = vsel %vm940, %v927, %v747
        %v945 = vsel %vm940, %v928, %v749
        %v946 = vsel %vm940, %v929, %v751
        %v947 = vsel %vm940, %v930, %v753
        %v948 = vsel %vm940, %v931, %v755
        %v949 = vsel %vm940, %v932, %v757
        %v950 = vsel %vm940, %v933, %v759
        %v951 = vsel %vm940, %v934, %v761
        %v952 = vsel %vm940, %v935, %v763
        %v953 = vsel %vm940, %v936, %v765
        %v954 = vsel %vm940, %v937, %v767
        %v955 = vsel %vm940, %v938, %v769
        %v956 = vsel %vm940, %v939, %v771
        %vm957 = vcmask 48128
        %v958 = vsel %vm957, %v941, %v787
        %v959 = vsel %vm957, %v942, %v787
        %v960 = vsel %vm957, %v943, %v787
        %v961 = vsel %vm957, %v944, %v787
        %v962 = vsel %vm957, %v945, %v789
        %v963 = vsel %vm957, %v946, %v791
        %v964 = vsel %vm957, %v947, %v793
        %v965 = vsel %vm957, %v948, %v795
        %v966 = vsel %vm957, %v949, %v797
        %v967 = vsel %vm957, %v950, %v799
        %v968 = vsel %vm957, %v951, %v801
        %v969 = vsel %vm957, %v952, %v803
        %v970 = vsel %vm957, %v953, %v805
        %v971 = vsel %vm957, %v954, %v807
        %v972 = vsel %vm957, %v955, %v809
        %v973 = vsel %vm957, %v956, %v811
        %vm974 = vcmask 64512
        %v975 = vsel %vm974, %v958, %v828
        %v976 = vsel %vm974, %v959, %v830
        %v977 = vsel %vm974, %v960, %v832
        %v978 = vsel %vm974, %v961, %v834
        %v979 = vsel %vm974, %v962, %v836
        %v980 = vsel %vm974, %v963, %v838
        %v981 = vsel %vm974, %v964, %v840
        %v982 = vsel %vm974, %v965, %v842
        %v983 = vsel %vm974, %v966, %v844
        %v984 = vsel %vm974, %v967, %v846
        %v985 = vsel %vm974, %v968, %v848
        %v986 = vsel %vm974, %v969, %v850
        %v987 = vsel %vm974, %v970, %v852
        %v988 = vsel %vm974, %v971, %v854
        %v989 = vsel %vm974, %v972, %v856
        %v990 = vsel %vm974, %v973, %v858
        %vm991 = vcmask 130048
        %v992 = vsel %vm991, %v975, %v876
        %v993 = vsel %vm991, %v976, %v878
        %v994 = vsel %vm991, %v977, %v880
        %v995 = vsel %vm991, %v978, %v882
        %v996 = vsel %vm991, %v979, %v884
        %v997 = vsel %vm991, %v980, %v886
        %v998 = vsel %vm991, %v981, %v888
        %v999 = vsel %vm991, %v982, %v890
        %v1000 = vsel %vm991, %v983, %v892
        %v1001 = vsel %vm991, %v984, %v894
        %v1002 = vsel %vm991, %v985, %v896
        %v1003 = vsel %vm991, %v986, %v898
        %v1004 = vsel %vm991, %v987, %v900
        %v1005 = vsel %vm991, %v988, %v902
        %v1006 = vsel %vm991, %v989, %v904
        %v1007 = vsel %vm991, %v990, %v906
        %vm1008 = vcmask 146432
        %v1009 = vsel %vm1008, %v992, %v878
        %v1010 = vsel %vm1008, %v993, %v880
        %v1011 = vsel %vm1008, %v994, %v882
        %v1012 = vsel %vm1008, %v995, %v884
        %v1013 = vsel %vm1008, %v996, %v886
        %v1014 = vsel %vm1008, %v997, %v888
        %v1015 = vsel %vm1008, %v998, %v890
        %v1016 = vsel %vm1008, %v999, %v892
        %v1017 = vsel %vm1008, %v1000, %v894
        %v1018 = vsel %vm1008, %v1001, %v896
        %v1019 = vsel %vm1008, %v1002, %v898
        %v1020 = vsel %vm1008, %v1003, %v900
        %v1021 = vsel %vm1008, %v1004, %v902
        %v1022 = vsel %vm1008, %v1005, %v904
        %v1023 = vsel %vm1008, %v1006, %v906
        %v1024 = vsel %vm1008, %v1007, %v906
        %vm1025 = vcmask 162816
        %v1026 = vsel %vm1025, %v1009, %v880
        %v1027 = vsel %vm1025, %v1010, %v882
        %v1028 = vsel %vm1025, %v1011, %v884
        %v1029 = vsel %vm1025, %v1012, %v886
        %v1030 = vsel %vm1025, %v1013, %v888
        %v1031 = vsel %vm1025, %v1014, %v890
        %v1032 = vsel %vm1025, %v1015, %v892
        %v1033 = vsel %vm1025, %v1016, %v894
        %v1034 = vsel %vm1025, %v1017, %v896
        %v1035 = vsel %vm1025, %v1018, %v898
        %v1036 = vsel %vm1025, %v1019, %v900
        %v1037 = vsel %vm1025, %v1020, %v902
        %v1038 = vsel %vm1025, %v1021, %v904
        %v1039 = vsel %vm1025, %v1022, %v906
        %v1040 = vsel %vm1025, %v1023, %v906
        %v1041 = vsel %vm1025, %v1024, %v906
        %vm1042 = vcmask 179200
        %v1043 = vsel %vm1042, %v1026, %v882
        %v1044 = vsel %vm1042, %v1027, %v884
        %v1045 = vsel %vm1042, %v1028, %v886
        %v1046 = vsel %vm1042, %v1029, %v888
        %v1047 = vsel %vm1042, %v1030, %v890
        %v1048 = vsel %vm1042, %v1031, %v892
        %v1049 = vsel %vm1042, %v1032, %v894
        %v1050 = vsel %vm1042, %v1033, %v896
        %v1051 = vsel %vm1042, %v1034, %v898
        %v1052 = vsel %vm1042, %v1035, %v900
        %v1053 = vsel %vm1042, %v1036, %v902
        %v1054 = vsel %vm1042, %v1037, %v904
        %v1055 = vsel %vm1042, %v1038, %v906
        %v1056 = vsel %vm1042, %v1039, %v906
        %v1057 = vsel %vm1042, %v1040, %v906
        %v1058 = vsel %vm1042, %v1041, %v906
        %v1059 = vld [vmem:[%s3] sm:$0xff]
        %v1060 = vld [vmem:[%s3 + $0x8] sm:$0xff]
        %v1061 = vld [vmem:[%s3 + $0x10] sm:$0xff]
        %v1062 = vld [vmem:[%s4] sm:$0x1]
        %v1064 = vlaneseq
        %v1065 = vshrl.u32 %v1064, 7
        %v1066 = vsub.s32 0, %v1065
        %v1067 = vrot.slane %v1062, %v1066
        %vm1069 = vcmask 195584
        %v1071 = vsel %vm1069, %v1043, 0
        %v1074 = vsel %vm1069, %v1044, 0
        %v1077 = vsel %vm1069, %v1045, 0
        %v1080 = vsel %vm1069, %v1046, 0
        %v1083 = vsel %vm1069, %v1047, 0
        %v1086 = vsel %vm1069, %v1048, 0
        %v1089 = vsel %vm1069, %v1049, 0
        %v1092 = vsel %vm1069, %v1050, 0
        %v1095 = vsel %vm1069, %v1051, 0
        %v1098 = vsel %vm1069, %v1052, 0
        %v1101 = vsel %vm1069, %v1053, 0
        %v1104 = vsel %vm1069, %v1054, 0
        %v1107 = vsel %vm1069, %v1055, 0
        %v1110 = vsel %vm1069, %v1056, 0
        %v1113 = vsel %vm1069, %v1057, 0
        %v1116 = vsel %vm1069, %v1058, 0
        %1118 = vmatprep.subr.mxu0 0.0
        %1119 = vmatpush1.msra.mxu0 %v1059
        %1120 = vmatprep.subr.mxu0 0.0
        %1121 = vmatpush1.msra.mxu0 %v1060
        %1122 = vmatprep.subr.mxu0 0.0
        %1123 = vmatpush1.msra.mxu0 %v1061
        %1124 = vmatprep.subr.mxu0 0.0
        %1125 = vmatpush1.msra.mxu0 0.0
        %1126 = vmatprep.subr.mxu0 0.0
        %1127 = vmatpush1.msra.mxu0 0.0
        %1128 = vmatprep.subr.mxu0 0.0
        %1129 = vmatpush1.msra.mxu0 0.0
        %1130 = vmatprep.subr.mxu0 0.0
        %1131 = vmatpush1.msra.mxu0 0.0
        %1132 = vmatprep.subr.mxu0 0.0
        %1133 = vmatpush1.msra.mxu0 0.0
        %1134 = vmatprep.subr.mxu0 0.0
        %1135 = vmatpush1.msra.mxu0 0.0
        %1136 = vmatprep.subr.mxu0 0.0
        %1137 = vmatpush1.msra.mxu0 0.0
        %1138 = vmatprep.subr.mxu0 0.0
        %1139 = vmatpush1.msra.mxu0 0.0
        %1140 = vmatprep.subr.mxu0 0.0
        %1141 = vmatpush1.msra.mxu0 0.0
        %1142 = vmatprep.subr.mxu0 0.0
        %1143 = vmatpush1.msra.mxu0 0.0
        %1144 = vmatprep.subr.mxu0 0.0
        %1145 = vmatpush1.msra.mxu0 0.0
        %1146 = vmatprep.subr.mxu0 0.0
        %1147 = vmatpush1.msra.mxu0 0.0
        %1148 = vmatprep.subr.mxu0 0.0
        %1149 = vmatpush1.msra.mxu0 0.0
        %1150 = vmatprep.subr.mxu0 0.0
        %1151 = vmatpush1.msra.mxu0 0.0
        %1152 = vmatprep.subr.mxu0 0.0
        %1153 = vmatpush1.msra.mxu0 0.0
        %1154 = vmatprep.subr.mxu0 0.0
        %1155 = vmatpush1.msra.mxu0 0.0
        %1156 = vmatprep.subr.mxu0 0.0
        %1157 = vmatpush1.msra.mxu0 0.0
        %1158 = vmatprep.subr.mxu0 0.0
        %1159 = vmatpush1.msra.mxu0 0.0
        %1160 = vmatprep.subr.mxu0 0.0
        %1161 = vmatpush1.msra.mxu0 0.0
        %1162 = vmatprep.subr.mxu0 0.0
        %1163 = vmatpush1.msra.mxu0 0.0
        %1164 = vmatprep.subr.mxu0 0.0
        %1165 = vmatpush1.msra.mxu0 0.0
        %1166 = vmatprep.subr.mxu0 0.0
        %1167 = vmatpush1.msra.mxu0 0.0
        %1168 = vmatprep.subr.mxu0 0.0
        %1169 = vmatpush1.msra.mxu0 0.0
        %1170 = vmatprep.subr.mxu0 0.0
        %1171 = vmatpush1.msra.mxu0 0.0
        %1172 = vmatprep.subr.mxu0 0.0
        %1173 = vmatpush1.msra.mxu0 0.0
        %1174 = vmatprep.subr.mxu0 0.0
        %1175 = vmatpush1.msra.mxu0 0.0
        %1176 = vmatprep.subr.mxu0 0.0
        %1177 = vmatpush1.msra.mxu0 0.0
        %1178 = vmatprep.subr.mxu0 0.0
        %1179 = vmatpush1.msra.mxu0 0.0
        %1180 = vmatprep.subr.mxu0 0.0
        %1181 = vmatpush1.msra.mxu0 0.0
        %1182 = vmatprep.mubr.f32.mxu0 0.0
        %1183 = vmatmul.mubr.f32.gmra.mrb[0].mxu0 %v1071
        %v1184 = vpop.f32.mrb[0].mxu0
        %v1185 = vadd.f32 %v1067, %v1184
        %v1186 = vpop.f32.mrb[0].mxu0
        %1187 = vmatprep.mubr.f32.mxu0 0.0
        %1188 = vmatmul.mubr.f32.gmra.mrb[0].mxu0 %v1074
        %v1189 = vpop.f32.mrb[0].mxu0
        %v1190 = vadd.f32 %v1067, %v1189
        %v1191 = vpop.f32.mrb[0].mxu0
        %1192 = vmatprep.mubr.f32.mxu0 0.0
        %1193 = vmatmul.mubr.f32.gmra.mrb[0].mxu0 %v1077
        %v1194 = vpop.f32.mrb[0].mxu0
        %v1195 = vadd.f32 %v1067, %v1194
        %v1196 = vpop.f32.mrb[0].mxu0
        %1197 = vmatprep.mubr.f32.mxu0 0.0
        %1198 = vmatmul.mubr.f32.gmra.mrb[0].mxu0 %v1080
        %v1199 = vpop.f32.mrb[0].mxu0
        %v1200 = vadd.f32 %v1067, %v1199
        %v1201 = vpop.f32.mrb[0].mxu0
        %1202 = vmatprep.mubr.f32.mxu0 0.0
        %1203 = vmatmul.mubr.f32.gmra.mrb[0].mxu0 %v1083
        %v1204 = vpop.f32.mrb[0].mxu0
        %v1205 = vadd.f32 %v1067, %v1204
        %v1206 = vpop.f32.mrb[0].mxu0
        %1207 = vmatprep.mubr.f32.mxu0 0.0
        %1208 = vmatmul.mubr.f32.gmra.mrb[0].mxu0 %v1086
        %v1209 = vpop.f32.mrb[0].mxu0
        %v1210 = vadd.f32 %v1067, %v1209
        %v1211 = vpop.f32.mrb[0].mxu0
        %1212 = vmatprep.mubr.f32.mxu0 0.0
        %1213 = vmatmul.mubr.f32.gmra.mrb[0].mxu0 %v1089
        %v1214 = vpop.f32.mrb[0].mxu0
        %v1215 = vadd.f32 %v1067, %v1214
        %v1216 = vpop.f32.mrb[0].mxu0
        %1217 = vmatprep.mubr.f32.mxu0 0.0
        %1218 = vmatmul.mubr.f32.gmra.mrb[0].mxu0 %v1092
        %v1219 = vpop.f32.mrb[0].mxu0
        %v1220 = vadd.f32 %v1067, %v1219
        %v1221 = vpop.f32.mrb[0].mxu0
        %1222 = vmatprep.mubr.f32.mxu0 0.0
        %1223 = vmatmul.mubr.f32.gmra.mrb[0].mxu0 %v1095
        %v1224 = vpop.f32.mrb[0].mxu0
        %v1225 = vadd.f32 %v1067, %v1224
        %v1226 = vpop.f32.mrb[0].mxu0
        %1227 = vmatprep.mubr.f32.mxu0 0.0
        %1228 = vmatmul.mubr.f32.gmra.mrb[0].mxu0 %v1098
        %v1229 = vpop.f32.mrb[0].mxu0
        %v1230 = vadd.f32 %v1067, %v1229
        %v1231 = vpop.f32.mrb[0].mxu0
        %1232 = vmatprep.mubr.f32.mxu0 0.0
        %1233 = vmatmul.mubr.f32.gmra.mrb[0].mxu0 %v1101
        %v1234 = vpop.f32.mrb[0].mxu0
        %v1235 = vadd.f32 %v1067, %v1234
        %v1236 = vpop.f32.mrb[0].mxu0
        %1237 = vmatprep.mubr.f32.mxu0 0.0
        %1238 = vmatmul.mubr.f32.gmra.mrb[0].mxu0 %v1104
        %v1239 = vpop.f32.mrb[0].mxu0
        %v1240 = vadd.f32 %v1067, %v1239
        %v1241 = vpop.f32.mrb[0].mxu0
        %1242 = vmatprep.mubr.f32.mxu0 0.0
        %1243 = vmatmul.mubr.f32.gmra.mrb[0].mxu0 %v1107
        %v1244 = vpop.f32.mrb[0].mxu0
        %v1245 = vadd.f32 %v1067, %v1244
        %v1246 = vpop.f32.mrb[0].mxu0
        %1247 = vmatprep.mubr.f32.mxu0 0.0
        %1248 = vmatmul.mubr.f32.gmra.mrb[0].mxu0 %v1110
        %v1249 = vpop.f32.mrb[0].mxu0
        %v1250 = vadd.f32 %v1067, %v1249
        %v1251 = vpop.f32.mrb[0].mxu0
        %1252 = vmatprep.mubr.f32.mxu0 0.0
        %1253 = vmatmul.mubr.f32.gmra.mrb[0].mxu0 %v1113
        %v1254 = vpop.f32.mrb[0].mxu0
        %v1255 = vadd.f32 %v1067, %v1254
        %v1256 = vpop.f32.mrb[0].mxu0
        %1257 = vmatprep.mubr.f32.mxu0 0.0
        %1258 = vmatmul.mubr.f32.gmra.mrb[0].mxu0 %v1116
        %v1259 = vpop.f32.mrb[0].mxu0
        %v1260 = vadd.f32 %v1067, %v1259
        %v1261 = vpop.f32.mrb[0].mxu0
        %1262 = vdwg.mxu0
        %1263 = vrot.lane.b32.xlu0 %v590, 120
        %v1264 = vpop.permute.xlu0 %1263
        %1265 = vrot.lane.b32.xlu0 %v591, 120
        %v1266 = vpop.permute.xlu0 %1265
        %1267 = vrot.lane.b32.xlu0 %v592, 120
        %v1268 = vpop.permute.xlu0 %1267
        %1269 = vrot.lane.b32.xlu0 %v593, 120
        %v1270 = vpop.permute.xlu0 %1269
        %1271 = vrot.lane.b32.xlu0 %v594, 120
        %v1272 = vpop.permute.xlu0 %1271
        %1273 = vrot.lane.b32.xlu0 %v595, 120
        %v1274 = vpop.permute.xlu0 %1273
        %1275 = vrot.lane.b32.xlu0 %v596, 120
        %v1276 = vpop.permute.xlu0 %1275
        %1277 = vrot.lane.b32.xlu0 %v597, 120
        %v1278 = vpop.permute.xlu0 %1277
        %1279 = vrot.lane.b32.xlu0 %v598, 120
        %v1280 = vpop.permute.xlu0 %1279
        %1281 = vrot.lane.b32.xlu0 %v599, 120
        %v1282 = vpop.permute.xlu0 %1281
        %1283 = vrot.lane.b32.xlu0 %v600, 120
        %v1284 = vpop.permute.xlu0 %1283
        %1285 = vrot.lane.b32.xlu0 %v601, 120
        %v1286 = vpop.permute.xlu0 %1285
        %1287 = vrot.lane.b32.xlu0 %v602, 120
        %v1288 = vpop.permute.xlu0 %1287
        %1289 = vrot.lane.b32.xlu0 %v603, 120
        %v1290 = vpop.permute.xlu0 %1289
        %1291 = vrot.lane.b32.xlu0 %v604, 120
        %v1292 = vpop.permute.xlu0 %1291
        %1308 = vrot.lane.b32.xlu0 %v605, 120
        %v1309 = vpop.permute.xlu0 %1308
        %v1311 = vmax.f32 %v1264, 0.0
        %v1312 = vmax.f32 %v1264, %v1266
        %v1313 = vmax.f32 %v1266, %v1268
        %v1314 = vmax.f32 %v1268, %v1270
        %v1315 = vmax.f32 %v1270, %v1272
        %v1316 = vmax.f32 %v1272, %v1274
        %v1317 = vmax.f32 %v1274, %v1276
        %v1318 = vmax.f32 %v1276, %v1278
        %v1319 = vmax.f32 %v1278, %v1280
        %v1320 = vmax.f32 %v1280, %v1282
        %v1321 = vmax.f32 %v1282, %v1284
        %v1322 = vmax.f32 %v1284, %v1286
        %v1323 = vmax.f32 %v1286, %v1288
        %v1324 = vmax.f32 %v1288, %v1290
        %v1325 = vmax.f32 %v1290, %v1292
        %v1326 = vmax.f32 %v1292, %v1309
        %1327 = vrot.lane.b32.xlu0 0.0, 120
        %v1328 = vpop.permute.xlu0 %1327
        %v1330 = vmax.f32 %v1311, %v1266
        %v1331 = vmax.f32 %v1312, %v1268
        %v1332 = vmax.f32 %v1313, %v1270
        %v1333 = vmax.f32 %v1314, %v1272
        %v1334 = vmax.f32 %v1315, %v1274
        %v1335 = vmax.f32 %v1316, %v1276
        %v1336 = vmax.f32 %v1317, %v1278
        %v1337 = vmax.f32 %v1318, %v1280
        %v1338 = vmax.f32 %v1319, %v1282
        %v1339 = vmax.f32 %v1320, %v1284
        %v1340 = vmax.f32 %v1321, %v1286
        %v1341 = vmax.f32 %v1322, %v1288
        %v1342 = vmax.f32 %v1323, %v1290
        %v1343 = vmax.f32 %v1324, %v1292
        %v1344 = vmax.f32 %v1325, %v1309
        %v1345 = vmax.f32 %v1326, %v1328
        %v1346 = vld [vmem:[%s5] sm:$0x1]
        %v1348 = vlaneseq
        %v1349 = vshrl.u32 %v1348, 7
        %v1350 = vsub.s32 0, %v1349
        %v1351 = vrot.slane %v1346, %v1350
        %v1353 = vmul.f32 %v1330, %v1351
        %v1354 = vmul.f32 %v1331, %v1351
        %v1355 = vmul.f32 %v1332, %v1351
        %v1356 = vmul.f32 %v1333, %v1351
        %v1357 = vmul.f32 %v1334, %v1351
        %v1358 = vmul.f32 %v1335, %v1351
        %v1359 = vmul.f32 %v1336, %v1351
        %v1360 = vmul.f32 %v1337, %v1351
        %v1361 = vmul.f32 %v1338, %v1351
        %v1362 = vmul.f32 %v1339, %v1351
        %v1363 = vmul.f32 %v1340, %v1351
        %v1364 = vmul.f32 %v1341, %v1351
        %v1365 = vmul.f32 %v1342, %v1351
        %v1366 = vmul.f32 %v1343, %v1351
        %v1367 = vmul.f32 %v1344, %v1351
        %v1368 = vmul.f32 %v1345, %v1351
        %v1369 = vld [vmem:[%s6] sm:$0x1]
        %v1371 = vlaneseq
        %v1372 = vshrl.u32 %v1371, 7
        %v1373 = vsub.s32 0, %v1372
        %v1374 = vrot.slane %v1369, %v1373
        %v1376 = vadd.f32 %v1353, %v1374
        %v1377 = vadd.f32 %v1354, %v1374
        %v1378 = vadd.f32 %v1355, %v1374
        %v1379 = vadd.f32 %v1356, %v1374
        %v1380 = vadd.f32 %v1357, %v1374
        %v1381 = vadd.f32 %v1358, %v1374
        %v1382 = vadd.f32 %v1359, %v1374
        %v1383 = vadd.f32 %v1360, %v1374
        %v1384 = vadd.f32 %v1361, %v1374
        %v1385 = vadd.f32 %v1362, %v1374
        %v1386 = vadd.f32 %v1363, %v1374
        %v1387 = vadd.f32 %v1364, %v1374
        %v1388 = vadd.f32 %v1365, %v1374
        %v1389 = vadd.f32 %v1366, %v1374
        %v1390 = vadd.f32 %v1367, %v1374
        %v1391 = vadd.f32 %v1368, %v1374
        %1408 = vrot.lane.b32.xlu0 %v1376, 8
        %v1409 = vpop.permute.xlu0 %1408
        %1410 = vrot.lane.b32.xlu0 %v1377, 8
        %v1411 = vpop.permute.xlu0 %1410
        %1412 = vrot.lane.b32.xlu0 %v1378, 8
        %v1413 = vpop.permute.xlu0 %1412
        %1414 = vrot.lane.b32.xlu0 %v1379, 8
        %v1415 = vpop.permute.xlu0 %1414
        %1416 = vrot.lane.b32.xlu0 %v1380, 8
        %v1417 = vpop.permute.xlu0 %1416
        %1418 = vrot.lane.b32.xlu0 %v1381, 8
        %v1419 = vpop.permute.xlu0 %1418
        %1420 = vrot.lane.b32.xlu0 %v1382, 8
        %v1421 = vpop.permute.xlu0 %1420
        %1422 = vrot.lane.b32.xlu0 %v1383, 8
        %v1423 = vpop.permute.xlu0 %1422
        %1424 = vrot.lane.b32.xlu0 %v1384, 8
        %v1425 = vpop.permute.xlu0 %1424
        %1426 = vrot.lane.b32.xlu0 %v1385, 8
        %v1427 = vpop.permute.xlu0 %1426
        %1428 = vrot.lane.b32.xlu0 %v1386, 8
        %v1429 = vpop.permute.xlu0 %1428
        %1430 = vrot.lane.b32.xlu0 %v1387, 8
        %v1431 = vpop.permute.xlu0 %1430
        %1432 = vrot.lane.b32.xlu0 %v1388, 8
        %v1433 = vpop.permute.xlu0 %1432
        %1434 = vrot.lane.b32.xlu0 %v1389, 8
        %v1435 = vpop.permute.xlu0 %1434
        %1436 = vrot.lane.b32.xlu0 %v1390, 8
        %v1437 = vpop.permute.xlu0 %1436
        %1438 = vrot.lane.b32.xlu0 %v1391, 8
        %v1439 = vpop.permute.xlu0 %1438
        %v1456 = vsel %vm974, %v1185, %v1409
        %v1457 = vsel %vm974, %v1190, %v1411
        %v1458 = vsel %vm974, %v1195, %v1413
        %v1459 = vsel %vm974, %v1200, %v1415
        %v1460 = vsel %vm974, %v1205, %v1417
        %v1461 = vsel %vm974, %v1210, %v1419
        %v1462 = vsel %vm974, %v1215, %v1421
        %v1463 = vsel %vm974, %v1220, %v1423
        %v1464 = vsel %vm974, %v1225, %v1425
        %v1465 = vsel %vm974, %v1230, %v1427
        %v1466 = vsel %vm974, %v1235, %v1429
        %v1467 = vsel %vm974, %v1240, %v1431
        %v1468 = vsel %vm974, %v1245, %v1433
        %v1469 = vsel %vm974, %v1250, %v1435
        %v1470 = vsel %vm974, %v1255, %v1437
        %v1471 = vsel %vm974, %v1260, %v1439
        %vm1472 = vcmask 80896
        %v1473 = vsel %vm1472, %v1456, %v512
        %v1474 = vsel %vm1472, %v1457, %v517
        %v1475 = vsel %vm1472, %v1458, %v522
        %v1476 = vsel %vm1472, %v1459, %v527
        %v1477 = vsel %vm1472, %v1460, %v532
        %v1478 = vsel %vm1472, %v1461, %v537
        %v1479 = vsel %vm1472, %v1462, %v542
        %v1480 = vsel %vm1472, %v1463, %v547
        %v1481 = vsel %vm1472, %v1464, %v552
        %v1482 = vsel %vm1472, %v1465, %v557
        %v1483 = vsel %vm1472, %v1466, %v562
        %v1484 = vsel %vm1472, %v1467, %v567
        %v1485 = vsel %vm1472, %v1468, %v572
        %v1486 = vsel %vm1472, %v1469, %v577
        %v1487 = vsel %vm1472, %v1470, %v582
        %v1488 = vsel %vm1472, %v1471, %v587
        %v1489 = vadd.f32 %v1473, %v367
        %v1490 = vadd.f32 %v1474, %v368
        %v1491 = vadd.f32 %v1475, %v369
        %v1492 = vadd.f32 %v1476, %v370
        %v1493 = vadd.f32 %v1477, %v371
        %v1494 = vadd.f32 %v1478, %v372
        %v1495 = vadd.f32 %v1479, %v373
        %v1496 = vadd.f32 %v1480, %v374
        %v1497 = vadd.f32 %v1481, %v375
        %v1498 = vadd.f32 %v1482, %v376
        %v1499 = vadd.f32 %v1483, %v377
        %v1500 = vadd.f32 %v1484, %v378
        %v1501 = vadd.f32 %v1485, %v379
        %v1502 = vadd.f32 %v1486, %v380
        %v1503 = vadd.f32 %v1487, %v381
        %v1504 = vadd.f32 %v1488, %v382
        %v1505 = vmax.f32 %v1489, 0.0
        %v1506 = vmax.f32 %v1490, 0.0
        %v1507 = vmax.f32 %v1491, 0.0
        %v1508 = vmax.f32 %v1492, 0.0
        %v1509 = vmax.f32 %v1493, 0.0
        %v1510 = vmax.f32 %v1494, 0.0
        %v1511 = vmax.f32 %v1495, 0.0
        %v1512 = vmax.f32 %v1496, 0.0
        %v1513 = vmax.f32 %v1497, 0.0
        %v1514 = vmax.f32 %v1498, 0.0
        %v1515 = vmax.f32 %v1499, 0.0
        %v1516 = vmax.f32 %v1500, 0.0
        %v1517 = vmax.f32 %v1501, 0.0
        %v1518 = vmax.f32 %v1502, 0.0
        %v1519 = vmax.f32 %v1503, 0.0
        %v1520 = vmax.f32 %v1504, 0.0
        %1521 = vst.msk [vmem:[%s366] sm:$0xff] %vm392, %v1505
        %1522 = vst.msk [vmem:[%s366 + $0x8] sm:$0xff] %vm392, %v1506
        %1523 = vst.msk [vmem:[%s366 + $0x10] sm:$0xff] %vm392, %v1507
        %1524 = vst.msk [vmem:[%s366 + $0x18] sm:$0xff] %vm392, %v1508
        %1525 = vst.msk [vmem:[%s366 + $0x20] sm:$0xff] %vm392, %v1509
        %1526 = vst.msk [vmem:[%s366 + $0x28] sm:$0xff] %vm392, %v1510
        %1527 = vst.msk [vmem:[%s366 + $0x30] sm:$0xff] %vm392, %v1511
        %1528 = vst.msk [vmem:[%s366 + $0x38] sm:$0xff] %vm392, %v1512
        %1529 = vst.msk [vmem:[%s366 + $0x40] sm:$0xff] %vm392, %v1513
        %1530 = vst.msk [vmem:[%s366 + $0x48] sm:$0xff] %vm392, %v1514
        %1531 = vst.msk [vmem:[%s366 + $0x50] sm:$0xff] %vm392, %v1515
        %1532 = vst.msk [vmem:[%s366 + $0x58] sm:$0xff] %vm392, %v1516
        %1533 = vst.msk [vmem:[%s366 + $0x60] sm:$0xff] %vm392, %v1517
        %1534 = vst.msk [vmem:[%s366 + $0x68] sm:$0xff] %vm392, %v1518
        %1535 = vst.msk [vmem:[%s366 + $0x70] sm:$0xff] %vm392, %v1519
        %1536 = vst.msk [vmem:[%s366 + $0x78] sm:$0xff] %vm392, %v1520
        %s1537 = sand.u32 %s178, 1
        %s1538 = sand.u32 %s178, 1
        %s1539 = smul.addr %s1538, 128
        %s1540 = scalar_lea.vmem [#allocation3], %s1539
        // Predicated region
        $region87: #{ms_tcn_forward.1} parent=81 // pred_check
          %p1541 = pneg %p188
        $region88: #{ms_tcn_forward.1} parent=81 // pred_check_branch
          %1543 = sbr.rel (%p1541) target = $region90
        $region89: #{ms_tcn_forward.1} parent=81 // pred_region
          %s1544 = smul.addr %s18, 8
          %s1545 = scalar_lea.vmem %s7, %s1544
          // Predicated region
          $region91: #{ms_tcn_forward.1} parent=89 // pred_check
            _
          $region92: #{ms_tcn_forward.1} parent=89 // pred_check_branch
            %1547 = sbr.rel (0) target = $region94
          $region93: #{ms_tcn_forward.1} parent=89 // pred_region
            // Predicated region
            $region95: #{ms_tcn_forward.1} parent=93 // pred_check
              _
            $region96: #{ms_tcn_forward.1} parent=93 // pred_check_branch
              %1549 = sbr.rel (0) target = $region98
            $region97: #{ms_tcn_forward.1} parent=93 // pred_region
              // Predicated region
              $region110: #{ms_tcn_forward.1} parent=97 // pred_check
                _
              $region111: #{ms_tcn_forward.1} parent=97 // pred_check_branch
                %1594 = sbr.rel (0) target = $region113
              $region112: #{ms_tcn_forward.1} parent=97 // pred_region
                loop: start=0, step=1, limit=1
                $region114: #{ms_tcn_forward.1} parent=112 // loop_pre_header
                  _
                $region115: #{ms_tcn_forward.1} parent=112 // loop_header
                  %s1596 = sphi 0, %s1600
                  %p1597 = scmp.ge.s32.totalorder %s1596, 1
                  %s1601 = sphi %s1540, %s1540
                  %s1602 = sphi %s1545, %s1545
                $region116: #{ms_tcn_forward.1} parent=112 // loop_header_branch
                  %1599 = sbr.rel (%p1597) target = $region120
                $region117: #{ms_tcn_forward.1} parent=112 // loop_body
                  %v1603 = vld [vmem:[%s1601] sm:$0xff]
                  %1604 = vst [vmem:[%s1602] sm:$0xff] %v1603
                  %v1605 = vld [vmem:[%s1601 + $0x8] sm:$0xff]
                  %1606 = vst [vmem:[%s1602 + $0x10] sm:$0xff] %v1605
                  %v1607 = vld [vmem:[%s1601 + $0x10] sm:$0xff]
                  %1608 = vst [vmem:[%s1602 + $0x20] sm:$0xff] %v1607
                  %v1609 = vld [vmem:[%s1601 + $0x18] sm:$0xff]
                  %1610 = vst [vmem:[%s1602 + $0x30] sm:$0xff] %v1609
                  %v1611 = vld [vmem:[%s1601 + $0x20] sm:$0xff]
                  %1612 = vst [vmem:[%s1602 + $0x40] sm:$0xff] %v1611
                  %v1613 = vld [vmem:[%s1601 + $0x28] sm:$0xff]
                  %1614 = vst [vmem:[%s1602 + $0x50] sm:$0xff] %v1613
                  %v1615 = vld [vmem:[%s1601 + $0x30] sm:$0xff]
                  %1616 = vst [vmem:[%s1602 + $0x60] sm:$0xff] %v1615
                  %v1617 = vld [vmem:[%s1601 + $0x38] sm:$0xff]
                  %1618 = vst [vmem:[%s1602 + $0x70] sm:$0xff] %v1617
                  %v1619 = vld [vmem:[%s1601 + $0x40] sm:$0xff]
                  %1620 = vst [vmem:[%s1602 + $0x80] sm:$0xff] %v1619
                  %v1621 = vld [vmem:[%s1601 + $0x48] sm:$0xff]
                  %1622 = vst [vmem:[%s1602 + $0x90] sm:$0xff] %v1621
                  %v1623 = vld [vmem:[%s1601 + $0x50] sm:$0xff]
                  %1624 = vst [vmem:[%s1602 + $0xa0] sm:$0xff] %v1623
                  %v1625 = vld [vmem:[%s1601 + $0x58] sm:$0xff]
                  %1626 = vst [vmem:[%s1602 + $0xb0] sm:$0xff] %v1625
                  %v1627 = vld [vmem:[%s1601 + $0x60] sm:$0xff]
                  %1628 = vst [vmem:[%s1602 + $0xc0] sm:$0xff] %v1627
                  %v1629 = vld [vmem:[%s1601 + $0x68] sm:$0xff]
                  %1630 = vst [vmem:[%s1602 + $0xd0] sm:$0xff] %v1629
                  %v1631 = vld [vmem:[%s1601 + $0x70] sm:$0xff]
                  %1632 = vst [vmem:[%s1602 + $0xe0] sm:$0xff] %v1631
                  %v1633 = vld [vmem:[%s1601 + $0x78] sm:$0xff]
                  %1634 = vst [vmem:[%s1602 + $0xf0] sm:$0xff] %v1633
                $region118: #{ms_tcn_forward.1} parent=112 // loop_footer
                  %s1600 = sadd.s32 1, %s1596
                $region119: #{ms_tcn_forward.1} parent=112 // loop_footer_branch
                  %1595 = sbr.rel target = $region115
                $region120: #{ms_tcn_forward.1} parent=112 // loop_exit
                  _
              $region113: #{ms_tcn_forward.1} parent=97 // pred_fallthru
                _
              // Predicated region
              $region121: #{ms_tcn_forward.1} parent=97 // pred_check
                _
              $region122: #{ms_tcn_forward.1} parent=97 // pred_check_branch
                %1636 = sbr.rel target = $region124
              $region123: #{ms_tcn_forward.1} parent=97 // pred_region
                _
              $region124: #{ms_tcn_forward.1} parent=97 // pred_fallthru
                _
            $region98: #{ms_tcn_forward.1} parent=93 // pred_fallthru
              _
            // Predicated region
            $region99: #{ms_tcn_forward.1} parent=93 // pred_check
              _
            $region100: #{ms_tcn_forward.1} parent=93 // pred_check_branch
              %1551 = sbr.rel target = $region102
            $region101: #{ms_tcn_forward.1} parent=93 // pred_region
              loop: start=0, step=1, limit=1
              $region103: #{ms_tcn_forward.1} parent=101 // loop_pre_header
                _
              $region104: #{ms_tcn_forward.1} parent=101 // loop_header
                %s1554 = sphi 0, %s1558
                %p1555 = scmp.ge.s32.totalorder %s1554, 1
                %s1559 = sphi %s1540, %s1540
                %s1560 = sphi %s1545, %s1545
              $region105: #{ms_tcn_forward.1} parent=101 // loop_header_branch
                %1557 = sbr.rel (%p1555) target = $region109
              $region106: #{ms_tcn_forward.1} parent=101 // loop_body
                %v1561 = vld [vmem:[%s1559] sm:$0xff]
                %1562 = vst [vmem:[%s1560] sm:$0xff] %v1561
                %v1563 = vld [vmem:[%s1559 + $0x8] sm:$0xff]
                %1564 = vst [vmem:[%s1560 + $0x10] sm:$0xff] %v1563
                %v1565 = vld [vmem:[%s1559 + $0x10] sm:$0xff]
                %1566 = vst [vmem:[%s1560 + $0x20] sm:$0xff] %v1565
                %v1567 = vld [vmem:[%s1559 + $0x18] sm:$0xff]
                %1568 = vst [vmem:[%s1560 + $0x30] sm:$0xff] %v1567
                %v1569 = vld [vmem:[%s1559 + $0x20] sm:$0xff]
                %1570 = vst [vmem:[%s1560 + $0x40] sm:$0xff] %v1569
                %v1571 = vld [vmem:[%s1559 + $0x28] sm:$0xff]
                %1572 = vst [vmem:[%s1560 + $0x50] sm:$0xff] %v1571
                %v1573 = vld [vmem:[%s1559 + $0x30] sm:$0xff]
                %1574 = vst [vmem:[%s1560 + $0x60] sm:$0xff] %v1573
                %v1575 = vld [vmem:[%s1559 + $0x38] sm:$0xff]
                %1576 = vst [vmem:[%s1560 + $0x70] sm:$0xff] %v1575
                %v1577 = vld [vmem:[%s1559 + $0x40] sm:$0xff]
                %1578 = vst [vmem:[%s1560 + $0x80] sm:$0xff] %v1577
                %v1579 = vld [vmem:[%s1559 + $0x48] sm:$0xff]
                %1580 = vst [vmem:[%s1560 + $0x90] sm:$0xff] %v1579
                %v1581 = vld [vmem:[%s1559 + $0x50] sm:$0xff]
                %1582 = vst [vmem:[%s1560 + $0xa0] sm:$0xff] %v1581
                %v1583 = vld [vmem:[%s1559 + $0x58] sm:$0xff]
                %1584 = vst [vmem:[%s1560 + $0xb0] sm:$0xff] %v1583
                %v1585 = vld [vmem:[%s1559 + $0x60] sm:$0xff]
                %1586 = vst [vmem:[%s1560 + $0xc0] sm:$0xff] %v1585
                %v1587 = vld [vmem:[%s1559 + $0x68] sm:$0xff]
                %1588 = vst [vmem:[%s1560 + $0xd0] sm:$0xff] %v1587
                %v1589 = vld [vmem:[%s1559 + $0x70] sm:$0xff]
                %1590 = vst [vmem:[%s1560 + $0xe0] sm:$0xff] %v1589
                %v1591 = vld [vmem:[%s1559 + $0x78] sm:$0xff]
                %1592 = vst [vmem:[%s1560 + $0xf0] sm:$0xff] %v1591
              $region107: #{ms_tcn_forward.1} parent=101 // loop_footer
                %s1558 = sadd.s32 1, %s1554
              $region108: #{ms_tcn_forward.1} parent=101 // loop_footer_branch
                %1553 = sbr.rel target = $region104
              $region109: #{ms_tcn_forward.1} parent=101 // loop_exit
                _
            $region102: #{ms_tcn_forward.1} parent=93 // pred_fallthru
              _
          $region94: #{ms_tcn_forward.1} parent=89 // pred_fallthru
            _
          %1637 = vnop
        $region90: #{ms_tcn_forward.1} parent=81 // pred_fallthru
          _
      $region82: #{ms_tcn_forward.1} parent=5 // pred_fallthru
        _
      %p1638 = scmp.le.s32.totalorder 2, %s13
      // Predicated region
      $region125: #{ms_tcn_forward.1} parent=5 // pred_check
        %p1639 = pneg %p1638
      $region126: #{ms_tcn_forward.1} parent=5 // pred_check_branch
        %1641 = sbr.rel (%p1639) target = $region128
      $region127: #{ms_tcn_forward.1} parent=5 // pred_region
        %s1642 = ssub.s32 %s13, 2
        // Predicated region
        $region129: #{ms_tcn_forward.1} parent=127 // pred_check
          %p1643 = pneg %p194
        $region130: #{ms_tcn_forward.1} parent=127 // pred_check_branch
          %1645 = sbr.rel (%p1643) target = $region132
        $region131: #{ms_tcn_forward.1} parent=127 // pred_region
          %s1646 = sand.u32 %s179, 1
          %s1647 = sand.u32 %s179, 1
          %s1648 = smul.addr %s1647, 128
          %s1649 = scalar_lea.vmem [#allocation3], %s1648
        $region132: #{ms_tcn_forward.1} parent=127 // pred_fallthru
          _
      $region128: #{ms_tcn_forward.1} parent=5 // pred_fallthru
        _
    $region6: #{ms_tcn_forward.1} parent=1 // loop_footer
      %s17 = sadd.s32 1, %s13
    $region7: #{ms_tcn_forward.1} parent=1 // loop_footer_branch
      %12 = sbr.rel target = $region3
    $region8: #{ms_tcn_forward.1} parent=1 // loop_exit
      _

</llo_original>
